<compile_context>
chip_gen: v7x
topology: tpu7x:2x2x1
jax: 0.10.0
libtpu: 0.0.40
codegen_flags: <defaults>
</compile_context>

<pallas_src>
import functools

import jax
import jax.numpy as jnp
from jax.experimental import pallas as pl
from jax.experimental.pallas import tpu as pltpu


_HIDDEN_WIDTHS = (10, 5, 4, 3, 2)
_LAYER_WIDTHS = _HIDDEN_WIDTHS + (1,)
_N_MASK_ROWS = sum(_HIDDEN_WIDTHS)          # 24 dropout-masked activation rows


def _round_up(x, m):
    return ((x + m - 1) // m) * m


def _choose_tile(batch, tile_b):
    """Pick a 128-multiple batch tile; keep >=2 tiles when batch allows (v7x)."""
    cap = _round_up(max(int(batch), 1), 128)
    tb = min(_round_up(int(tile_b), 128), cap)
    if cap >= 256 and _round_up(batch, tb) // tb < 2:
        tb = _round_up((batch + 1) // 2, 128)
    return tb


def _dropout_mask(seed, dropout_prob, n_cols):
    """Pre-scaled inverted-dropout keep mask: 1/(1-p) where kept, 0 where dropped."""
    keep = jax.random.bernoulli(jax.random.PRNGKey(seed),
                                p=1.0 - dropout_prob,
                                shape=(_N_MASK_ROWS, n_cols))
    return keep.astype(jnp.float32) * jnp.float32(1.0 / (1.0 - dropout_prob))
    # TODO(synk): once pltpu.prng_random_bits works in the interpret fallback,
    # draw this 24-row mask in-kernel to avoid the extra ~96 B/sample HBM read.


def _mlp_kernel(*refs, dims, use_mask):
    """One batch tile. Layout: features on sublanes, batch on lanes.

    refs = (x_ref, [mask_ref], w1, b1, ..., w6, b6, out_ref)
      x_ref   : (input_dim, tb) f32
      mask_ref: (24, tb) f32 pre-scaled keep mask (training only)
      wN, bN  : (n_out, n_in), (n_out, 1) f32, resident VMEM
      out_ref : (1, tb) f32  (lane-dense store)
    """
    if use_mask:
        x_ref, mask_ref = refs[0], refs[1]
        param_refs = refs[2:-1]
    else:
        x_ref, mask_ref = refs[0], None
        param_refs = refs[1:-1]
    out_ref = refs[-1]

    n_layers = len(dims) - 1
    h = x_ref[...]                                   # (input_dim, tb) f32 block
    row = 0
    for li in range(n_layers):
        w = param_refs[2 * li][...]                  # (n_out, n_in)
        b = param_refs[2 * li + 1][...]              # (n_out, 1) -> lane broadcast
        # MXU contraction, f32 accumulate. HIGHEST keeps eval/train results
        # bit-comparable with the f32 reference on real TPUs (K<=16, so the
        # multi-pass cost is negligible).
        h = jnp.dot(w, h, preferred_element_type=jnp.float32,
                    precision=jax.lax.Precision.HIGHEST) + b
        if li < n_layers - 1:
            n_out = dims[li + 1]
            h = jnp.maximum(h, 0.0)                  # ReLU
            if use_mask:
                # Fused inverted dropout: mask already holds 1/(1-p) or 0.
                h = h * mask_ref[row:row + n_out, :]
                row += n_out

    out_ref[...] = jax.nn.sigmoid(h).astype(out_ref.dtype)


def init_params(key, input_dim):
    """Mimics torch.nn.Linear default init: U[-k, k], k = 1/sqrt(fan_in)."""
    dims = (input_dim,) + _LAYER_WIDTHS
    params = []
    for i in range(len(dims) - 1):
        fan_in, fan_out = dims[i], dims[i + 1]
        key, kw, kb = jax.random.split(key, 3)
        k = 1.0 / (fan_in ** 0.5)
        w = jax.random.uniform(kw, (fan_out, fan_in), jnp.float32, -k, k)
        b = jax.random.uniform(kb, (fan_out,), jnp.float32, -k, k)
        params.append((w, b))
    return params


def transaction_mlp_forward(x, params, *, dropout_prob=0.2, training=False,
                            seed=0, tile_b=32768):
    """Forward pass. x: (batch, input_dim) f32 -> (batch, 1) f32 probabilities."""
    batch, input_dim = x.shape
    dims = (input_dim,) + _LAYER_WIDTHS
    assert 0.0 <= float(dropout_prob) < 1.0, "dropout_prob must be in [0, 1)"
    use_mask = bool(training) and float(dropout_prob) > 0.0

    tb = _choose_tile(batch, tile_b)
    padded = _round_up(batch, tb)

    # Batch-on-lanes layout (layout plumbing; see TODO(synk) in header).
    xt = jnp.zeros((input_dim, padded), jnp.float32)
    xt = xt.at[:, :batch].set(jnp.asarray(x, jnp.float32).T)

    inputs = [xt]
    in_specs = [pl.BlockSpec((input_dim, tb), lambda i: (0, i))]

    if use_mask:
        mask = _dropout_mask(seed, float(dropout_prob), padded)
        inputs.append(mask)
        in_specs.append(pl.BlockSpec((_N_MASK_ROWS, tb), lambda i: (0, i)))

    for (w, b) in params:
        w = jnp.asarray(w, jnp.float32)
        b = jnp.asarray(b, jnp.float32).reshape(-1, 1)
        inputs += [w, b]
        # Full-shape resident VMEM blocks (no per-tile refetch, MXU-ready).
        in_specs += [pl.BlockSpec(w.shape, lambda i: (0, 0)),
                     pl.BlockSpec(b.shape, lambda i: (0, 0))]

    kernel = functools.partial(_mlp_kernel, dims=dims, use_mask=use_mask)

    out_t = pl.pallas_call(
        kernel,
        out_shape=jax.ShapeDtypeStruct((1, padded), jnp.float32),
        grid_spec=pltpu.PrefetchScalarGridSpec(
            num_scalar_prefetch=0,
            grid=(padded // tb,),
            in_specs=in_specs,
            out_specs=pl.BlockSpec((1, tb), lambda i: (0, i)),
        ),
        compiler_params=pltpu.CompilerParams(
            dimension_semantics=("parallel",),      # megacore-shard batch tiles
            vmem_limit_bytes=32 * 1024 * 1024),
    )(*inputs)

    return out_t[0, :batch].reshape(batch, 1)


def _reference_forward(x, params, mask=None):
    """Pure-JAX reference. mask (if given): (24, batch) pre-scaled keep mask."""
    h = jnp.asarray(x, jnp.float32)
    row = 0
    for i, (w, b) in enumerate(params):
        h = jnp.dot(h, w.T, precision=jax.lax.Precision.HIGHEST) + b
        if i < len(params) - 1:
            h = jnp.maximum(h, 0.0)
            if mask is not None:
                n = w.shape[0]
                h = h * mask[row:row + n, :].T
                row += n
    return jax.nn.sigmoid(h)


if __name__ == "__main__":
    key = jax.random.PRNGKey(0)
    input_dim = 16
    batch = 8
    dropout_prob = 0.2

    k_params, k_x = jax.random.split(key)
    params = init_params(k_params, input_dim)
    x = jax.random.normal(k_x, (batch, input_dim), dtype=jnp.float32)

    # Eval mode: dropout is identity (module.eval() behaviour) -> must match ref.
    out_eval = jax.block_until_ready(
        transaction_mlp_forward(x, params, dropout_prob=dropout_prob,
                                training=False))
    ref_eval = _reference_forward(x, params)
    assert out_eval.shape == (batch, 1)
    assert jnp.allclose(out_eval, ref_eval, atol=1e-5, rtol=1e-5), (
        f"eval max abs err {jnp.max(jnp.abs(out_eval - ref_eval))}")

    # Training mode: the kernel consumes the host-generated inverted-dropout
    # mask, so it must match the masked reference built from the same mask.
    seed = 123
    out_train = jax.block_until_ready(
        transaction_mlp_forward(x, params, dropout_prob=dropout_prob,
                                training=True, seed=seed))
    tb = _choose_tile(batch, 32768)
    padded = _round_up(batch, tb)
    mask = _dropout_mask(seed, dropout_prob, padded)
    ref_train = _reference_forward(x, params, mask=mask[:, :batch])
    assert out_train.shape == (batch, 1)
    assert jnp.allclose(out_train, ref_train, atol=1e-5, rtol=1e-5), (
        f"train max abs err {jnp.max(jnp.abs(out_train - ref_train))}")
    assert bool(jnp.all(jnp.isfinite(out_train)))
    assert bool(jnp.all((out_train > 0.0) & (out_train < 1.0)))

    print("KERNEL_OK")
</pallas_src>

<mosaic_0001>
module attributes {stable_mosaic.version = 11 : i64} {
  func.func @_mlp_kernel(%arg0: i32, %arg1: memref<16x128xf32, #tpu.memory_space<vmem>>, %arg2: memref<10x16xf32, #tpu.memory_space<vmem>>, %arg3: memref<10x1xf32, #tpu.memory_space<vmem>>, %arg4: memref<5x10xf32, #tpu.memory_space<vmem>>, %arg5: memref<5x1xf32, #tpu.memory_space<vmem>>, %arg6: memref<4x5xf32, #tpu.memory_space<vmem>>, %arg7: memref<4x1xf32, #tpu.memory_space<vmem>>, %arg8: memref<3x4xf32, #tpu.memory_space<vmem>>, %arg9: memref<3x1xf32, #tpu.memory_space<vmem>>, %arg10: memref<2x3xf32, #tpu.memory_space<vmem>>, %arg11: memref<2x1xf32, #tpu.memory_space<vmem>>, %arg12: memref<1x2xf32, #tpu.memory_space<vmem>>, %arg13: memref<1x1xf32, #tpu.memory_space<vmem>>, %arg14: memref<1x128xf32, #tpu.memory_space<vmem>>) attributes {dimension_semantics = [#tpu.dimension_semantics<parallel>], iteration_bounds = array<i64: 1>, scalar_prefetch = 0 : i64, scratch_operands = 0 : i64, tpu.core_type = #tpu.core_type<tc>, window_params = [{transform_indices = @transform_0, window_bounds = array<i64: 16, 128>}, {pipeline_mode = #tpu.pipeline_mode<synchronous>, transform_indices = @transform_1, window_bounds = array<i64: 10, 16>}, {pipeline_mode = #tpu.pipeline_mode<synchronous>, transform_indices = @transform_2, window_bounds = array<i64: 10, 1>}, {pipeline_mode = #tpu.pipeline_mode<synchronous>, transform_indices = @transform_3, window_bounds = array<i64: 5, 10>}, {pipeline_mode = #tpu.pipeline_mode<synchronous>, transform_indices = @transform_4, window_bounds = array<i64: 5, 1>}, {pipeline_mode = #tpu.pipeline_mode<synchronous>, transform_indices = @transform_5, window_bounds = array<i64: 4, 5>}, {pipeline_mode = #tpu.pipeline_mode<synchronous>, transform_indices = @transform_6, window_bounds = array<i64: 4, 1>}, {pipeline_mode = #tpu.pipeline_mode<synchronous>, transform_indices = @transform_7, window_bounds = array<i64: 3, 4>}, {pipeline_mode = #tpu.pipeline_mode<synchronous>, transform_indices = @transform_8, window_bounds = array<i64: 3, 1>}, {pipeline_mode = #tpu.pipeline_mode<synchronous>, transform_indices = @transform_9, window_bounds = array<i64: 2, 3>}, {pipeline_mode = #tpu.pipeline_mode<synchronous>, transform_indices = @transform_10, window_bounds = array<i64: 2, 1>}, {pipeline_mode = #tpu.pipeline_mode<synchronous>, transform_indices = @transform_11, window_bounds = array<i64: 1, 2>}, {pipeline_mode = #tpu.pipeline_mode<synchronous>, transform_indices = @transform_12, window_bounds = array<i64: 1, 1>}, {transform_indices = @transform_13, window_bounds = array<i64: 1, 128>}]} {
    %c0 = arith.constant 0 : index
    %c0_0 = arith.constant 0 : index
    %0 = vector.load %arg1[%c0, %c0_0] : memref<16x128xf32, #tpu.memory_space<vmem>>, vector<16x128xf32>
    %c0_1 = arith.constant 0 : index
    %c0_2 = arith.constant 0 : index
    %1 = vector.load %arg2[%c0_1, %c0_2] : memref<10x16xf32, #tpu.memory_space<vmem>>, vector<10x16xf32>
    %c0_3 = arith.constant 0 : index
    %c0_4 = arith.constant 0 : index
    %2 = vector.load %arg3[%c0_3, %c0_4] : memref<10x1xf32, #tpu.memory_space<vmem>>, vector<10x1xf32>
    %cst = arith.constant dense<0.000000e+00> : vector<10x128xf32>
    %3 = tpu.matmul %1, %0, %cst {dimension_numbers = #tpu.dot_dimension_numbers<[1], [0], [0], [1], [0, 0, 1, 1], [], []>, precision = #tpu.contract_precision<fp32>} : vector<10x16xf32>, vector<16x128xf32>, vector<10x128xf32> -> vector<10x128xf32>
    %4 = vector.broadcast %2 : vector<10x1xf32> to vector<10x128xf32>
    %5 = arith.addf %3, %4 : vector<10x128xf32>
    %cst_5 = arith.constant 0.000000e+00 : f32
    %6 = vector.broadcast %cst_5 : f32 to vector<10x128xf32>
    %7 = arith.maximumf %5, %6 : vector<10x128xf32>
    %c0_6 = arith.constant 0 : index
    %c0_7 = arith.constant 0 : index
    %8 = vector.load %arg4[%c0_6, %c0_7] : memref<5x10xf32, #tpu.memory_space<vmem>>, vector<5x10xf32>
    %c0_8 = arith.constant 0 : index
    %c0_9 = arith.constant 0 : index
    %9 = vector.load %arg5[%c0_8, %c0_9] : memref<5x1xf32, #tpu.memory_space<vmem>>, vector<5x1xf32>
    %cst_10 = arith.constant dense<0.000000e+00> : vector<5x128xf32>
    %10 = tpu.matmul %8, %7, %cst_10 {dimension_numbers = #tpu.dot_dimension_numbers<[1], [0], [0], [1], [0, 0, 1, 1], [], []>, precision = #tpu.contract_precision<fp32>} : vector<5x10xf32>, vector<10x128xf32>, vector<5x128xf32> -> vector<5x128xf32>
    %11 = vector.broadcast %9 : vector<5x1xf32> to vector<5x128xf32>
    %12 = arith.addf %10, %11 : vector<5x128xf32>
    %cst_11 = arith.constant 0.000000e+00 : f32
    %13 = vector.broadcast %cst_11 : f32 to vector<5x128xf32>
    %14 = arith.maximumf %12, %13 : vector<5x128xf32>
    %c0_12 = arith.constant 0 : index
    %c0_13 = arith.constant 0 : index
    %15 = vector.load %arg6[%c0_12, %c0_13] : memref<4x5xf32, #tpu.memory_space<vmem>>, vector<4x5xf32>
    %c0_14 = arith.constant 0 : index
    %c0_15 = arith.constant 0 : index
    %16 = vector.load %arg7[%c0_14, %c0_15] : memref<4x1xf32, #tpu.memory_space<vmem>>, vector<4x1xf32>
    %cst_16 = arith.constant dense<0.000000e+00> : vector<4x128xf32>
    %17 = tpu.matmul %15, %14, %cst_16 {dimension_numbers = #tpu.dot_dimension_numbers<[1], [0], [0], [1], [0, 0, 1, 1], [], []>, precision = #tpu.contract_precision<fp32>} : vector<4x5xf32>, vector<5x128xf32>, vector<4x128xf32> -> vector<4x128xf32>
    %18 = vector.broadcast %16 : vector<4x1xf32> to vector<4x128xf32>
    %19 = arith.addf %17, %18 : vector<4x128xf32>
    %cst_17 = arith.constant 0.000000e+00 : f32
    %20 = vector.broadcast %cst_17 : f32 to vector<4x128xf32>
    %21 = arith.maximumf %19, %20 : vector<4x128xf32>
    %c0_18 = arith.constant 0 : index
    %c0_19 = arith.constant 0 : index
    %22 = vector.load %arg8[%c0_18, %c0_19] : memref<3x4xf32, #tpu.memory_space<vmem>>, vector<3x4xf32>
    %c0_20 = arith.constant 0 : index
    %c0_21 = arith.constant 0 : index
    %23 = vector.load %arg9[%c0_20, %c0_21] : memref<3x1xf32, #tpu.memory_space<vmem>>, vector<3x1xf32>
    %cst_22 = arith.constant dense<0.000000e+00> : vector<3x128xf32>
    %24 = tpu.matmul %22, %21, %cst_22 {dimension_numbers = #tpu.dot_dimension_numbers<[1], [0], [0], [1], [0, 0, 1, 1], [], []>, precision = #tpu.contract_precision<fp32>} : vector<3x4xf32>, vector<4x128xf32>, vector<3x128xf32> -> vector<3x128xf32>
    %25 = vector.broadcast %23 : vector<3x1xf32> to vector<3x128xf32>
    %26 = arith.addf %24, %25 : vector<3x128xf32>
    %cst_23 = arith.constant 0.000000e+00 : f32
    %27 = vector.broadcast %cst_23 : f32 to vector<3x128xf32>
    %28 = arith.maximumf %26, %27 : vector<3x128xf32>
    %c0_24 = arith.constant 0 : index
    %c0_25 = arith.constant 0 : index
    %29 = vector.load %arg10[%c0_24, %c0_25] : memref<2x3xf32, #tpu.memory_space<vmem>>, vector<2x3xf32>
    %c0_26 = arith.constant 0 : index
    %c0_27 = arith.constant 0 : index
    %30 = vector.load %arg11[%c0_26, %c0_27] : memref<2x1xf32, #tpu.memory_space<vmem>>, vector<2x1xf32>
    %cst_28 = arith.constant dense<0.000000e+00> : vector<2x128xf32>
    %31 = tpu.matmul %29, %28, %cst_28 {dimension_numbers = #tpu.dot_dimension_numbers<[1], [0], [0], [1], [0, 0, 1, 1], [], []>, precision = #tpu.contract_precision<fp32>} : vector<2x3xf32>, vector<3x128xf32>, vector<2x128xf32> -> vector<2x128xf32>
    %32 = vector.broadcast %30 : vector<2x1xf32> to vector<2x128xf32>
    %33 = arith.addf %31, %32 : vector<2x128xf32>
    %cst_29 = arith.constant 0.000000e+00 : f32
    %34 = vector.broadcast %cst_29 : f32 to vector<2x128xf32>
    %35 = arith.maximumf %33, %34 : vector<2x128xf32>
    %c0_30 = arith.constant 0 : index
    %c0_31 = arith.constant 0 : index
    %36 = vector.load %arg12[%c0_30, %c0_31] : memref<1x2xf32, #tpu.memory_space<vmem>>, vector<1x2xf32>
    %c0_32 = arith.constant 0 : index
    %c0_33 = arith.constant 0 : index
    %37 = vector.load %arg13[%c0_32, %c0_33] : memref<1x1xf32, #tpu.memory_space<vmem>>, vector<1x1xf32>
    %cst_34 = arith.constant dense<0.000000e+00> : vector<1x128xf32>
    %38 = tpu.matmul %36, %35, %cst_34 {dimension_numbers = #tpu.dot_dimension_numbers<[1], [0], [0], [1], [0, 0, 1, 1], [], []>, precision = #tpu.contract_precision<fp32>} : vector<1x2xf32>, vector<2x128xf32>, vector<1x128xf32> -> vector<1x128xf32>
    %39 = vector.broadcast %37 : vector<1x1xf32> to vector<1x128xf32>
    %40 = arith.addf %38, %39 : vector<1x128xf32>
    %41 = arith.negf %40 : vector<1x128xf32>
    %42 = math.exp %41 : vector<1x128xf32>
    %cst_35 = arith.constant 1.000000e+00 : f32
    %43 = vector.broadcast %cst_35 : f32 to vector<1x128xf32>
    %44 = arith.addf %43, %42 : vector<1x128xf32>
    %45 = arith.divf %43, %44 : vector<1x128xf32>
    %c0_36 = arith.constant 0 : index
    %c0_37 = arith.constant 0 : index
    %46 = vector.load %arg14[%c0_36, %c0_37] : memref<1x128xf32, #tpu.memory_space<vmem>>, vector<1x128xf32>
    tpu.vector_store %arg14[%c0_36, %c0_37], %45 {strides = array<i32>} : memref<1x128xf32, #tpu.memory_space<vmem>>, vector<1x128xf32>,
    return
  }
  func.func @transform_0(%arg0: i32) -> (i32, i32) {
    %c0_i32 = arith.constant 0 : i32
    %c0_i32_0 = arith.constant 0 : i32
    return %c0_i32, %arg0 : i32, i32
  }
  func.func @transform_1(%arg0: i32) -> (i32, i32) {
    %c0_i32 = arith.constant 0 : i32
    %c0_i32_0 = arith.constant 0 : i32
    %c0_i32_1 = arith.constant 0 : i32
    return %c0_i32, %c0_i32_0 : i32, i32
  }
  func.func @transform_2(%arg0: i32) -> (i32, i32) {
    %c0_i32 = arith.constant 0 : i32
    %c0_i32_0 = arith.constant 0 : i32
    %c0_i32_1 = arith.constant 0 : i32
    return %c0_i32, %c0_i32_0 : i32, i32
  }
  func.func @transform_3(%arg0: i32) -> (i32, i32) {
    %c0_i32 = arith.constant 0 : i32
    %c0_i32_0 = arith.constant 0 : i32
    %c0_i32_1 = arith.constant 0 : i32
    return %c0_i32, %c0_i32_0 : i32, i32
  }
  func.func @transform_4(%arg0: i32) -> (i32, i32) {
    %c0_i32 = arith.constant 0 : i32
    %c0_i32_0 = arith.constant 0 : i32
    %c0_i32_1 = arith.constant 0 : i32
    return %c0_i32, %c0_i32_0 : i32, i32
  }
  func.func @transform_5(%arg0: i32) -> (i32, i32) {
    %c0_i32 = arith.constant 0 : i32
    %c0_i32_0 = arith.constant 0 : i32
    %c0_i32_1 = arith.constant 0 : i32
    return %c0_i32, %c0_i32_0 : i32, i32
  }
  func.func @transform_6(%arg0: i32) -> (i32, i32) {
    %c0_i32 = arith.constant 0 : i32
    %c0_i32_0 = arith.constant 0 : i32
    %c0_i32_1 = arith.constant 0 : i32
    return %c0_i32, %c0_i32_0 : i32, i32
  }
  func.func @transform_7(%arg0: i32) -> (i32, i32) {
    %c0_i32 = arith.constant 0 : i32
    %c0_i32_0 = arith.constant 0 : i32
    %c0_i32_1 = arith.constant 0 : i32
    return %c0_i32, %c0_i32_0 : i32, i32
  }
  func.func @transform_8(%arg0: i32) -> (i32, i32) {
    %c0_i32 = arith.constant 0 : i32
    %c0_i32_0 = arith.constant 0 : i32
    %c0_i32_1 = arith.constant 0 : i32
    return %c0_i32, %c0_i32_0 : i32, i32
  }
  func.func @transform_9(%arg0: i32) -> (i32, i32) {
    %c0_i32 = arith.constant 0 : i32
    %c0_i32_0 = arith.constant 0 : i32
    %c0_i32_1 = arith.constant 0 : i32
    return %c0_i32, %c0_i32_0 : i32, i32
  }
  func.func @transform_10(%arg0: i32) -> (i32, i32) {
    %c0_i32 = arith.constant 0 : i32
    %c0_i32_0 = arith.constant 0 : i32
    %c0_i32_1 = arith.constant 0 : i32
    return %c0_i32, %c0_i32_0 : i32, i32
  }
  func.func @transform_11(%arg0: i32) -> (i32, i32) {
    %c0_i32 = arith.constant 0 : i32
    %c0_i32_0 = arith.constant 0 : i32
    %c0_i32_1 = arith.constant 0 : i32
    return %c0_i32, %c0_i32_0 : i32, i32
  }
  func.func @transform_12(%arg0: i32) -> (i32, i32) {
    %c0_i32 = arith.constant 0 : i32
    %c0_i32_0 = arith.constant 0 : i32
    %c0_i32_1 = arith.constant 0 : i32
    return %c0_i32, %c0_i32_0 : i32, i32
  }
  func.func @transform_13(%arg0: i32) -> (i32, i32) {
    %c0_i32 = arith.constant 0 : i32
    %c0_i32_0 = arith.constant 0 : i32
    return %c0_i32, %arg0 : i32, i32
  }
}

</mosaic_0001>

<llo_original>
// kernel: tpu_custom_call.1
$region0: #{tpu_custom_call.1}
  #allocation0 [shape = 'u32[]', space=smem, size = 0x4, offset = 0x4, fixed_abs, tag = 'smem constant byte address 0x4 - core index']
  #allocation1 [shape = 'u32[144,128]{1,0:T(1,128)}', space=vmem, size = 0x12000, scoped, tag = 'internal scratch']
  #allocation2 [shape = 'f32[1,1]{1,0:T(1,128)S(1)}', space=vmem, size = 0x200, scoped, tag = 'scoped memory for tpu_custom_call.1']
  %s0 = inlined_call_operand.vmem [shape: f32[16,128], index: 0, kind: input, shape index: {}]
  %s1 = inlined_call_operand.vmem [shape: f32[10,16], index: 1, kind: input, shape index: {}]
  %s2 = inlined_call_operand.vmem [shape: f32[10,1], index: 2, kind: input, shape index: {}]
  %s3 = inlined_call_operand.vmem [shape: f32[5,10], index: 3, kind: input, shape index: {}]
  %s4 = inlined_call_operand.vmem [shape: f32[5,1], index: 4, kind: input, shape index: {}]
  %s5 = inlined_call_operand.vmem [shape: f32[4,5], index: 5, kind: input, shape index: {}]
  %s6 = inlined_call_operand.vmem [shape: f32[4,1], index: 6, kind: input, shape index: {}]
  %s7 = inlined_call_operand.vmem [shape: f32[3,4], index: 7, kind: input, shape index: {}]
  %s8 = inlined_call_operand.vmem [shape: f32[3,1], index: 8, kind: input, shape index: {}]
  %s9 = inlined_call_operand.vmem [shape: f32[2,3], index: 9, kind: input, shape index: {}]
  %s10 = inlined_call_operand.vmem [shape: f32[2,1], index: 10, kind: input, shape index: {}]
  %s11 = inlined_call_operand.vmem [shape: f32[1,2], index: 11, kind: input, shape index: {}]
  %s12 = inlined_call_operand.<no memory space> [shape: f32[1,1], index: 12, kind: input, shape index: {}]
  %s13 = inlined_call_operand.hbm [shape: f32[1,128], index: 13, kind: output, shape index: {}]
  %s14 = sld [smem:[#allocation0]]
  $region62: #{tpu_custom_call.1} parent=0
    _
  %s16 = ssub.s32 1, %s14
  %s17 = scalar_select 0, %s16, %s14
  %v18 = vstv %s12
  %19 = vst [vmem:[#allocation2] sm:$0x1] %v18
  $region1: #{tpu_custom_call.1} parent=0
    #allocation3 [shape = 'u8[512]{0}', space=vmem, size = 0x400, scoped, tag = 'output window, operand 0, single buffered']
    #allocation4 [shape = 's32[1]{0}', space=sflag, size = 0x4, scoped, tag = 'scoped memory for tpu_custom_call.1']
    %20 = vsyncpa [#allocation4], 0
    // Predicated region
    $region2: #{tpu_custom_call.1} parent=1 // pred_check
      _
    $region3: #{tpu_custom_call.1} parent=1 // pred_check_branch
      %22 = sbr.rel (0) target = $region5
    $region4: #{tpu_custom_call.1} parent=1 // pred_region
      _
    $region5: #{tpu_custom_call.1} parent=1 // pred_fallthru
      _
    // Predicated region
    $region6: #{tpu_custom_call.1} parent=1 // pred_check
      _
    $region7: #{tpu_custom_call.1} parent=1 // pred_check_branch
      %24 = sbr.rel (0) target = $region9
    $region8: #{tpu_custom_call.1} parent=1 // pred_region
      _
    $region9: #{tpu_custom_call.1} parent=1 // pred_fallthru
      _
    // Predicated region
    $region10: #{tpu_custom_call.1} parent=1 // pred_check
      _
    $region11: #{tpu_custom_call.1} parent=1 // pred_check_branch
      %26 = sbr.rel (0) target = $region13
    $region12: #{tpu_custom_call.1} parent=1 // pred_region
      _
    $region13: #{tpu_custom_call.1} parent=1 // pred_fallthru
      _
    // Predicated region
    $region14: #{tpu_custom_call.1} parent=1 // pred_check
      _
    $region15: #{tpu_custom_call.1} parent=1 // pred_check_branch
      %28 = sbr.rel (0) target = $region17
    $region16: #{tpu_custom_call.1} parent=1 // pred_region
      _
    $region17: #{tpu_custom_call.1} parent=1 // pred_fallthru
      _
    // Predicated region
    $region18: #{tpu_custom_call.1} parent=1 // pred_check
      _
    $region19: #{tpu_custom_call.1} parent=1 // pred_check_branch
      %30 = sbr.rel (0) target = $region21
    $region20: #{tpu_custom_call.1} parent=1 // pred_region
      _
    $region21: #{tpu_custom_call.1} parent=1 // pred_fallthru
      _
    // Predicated region
    $region22: #{tpu_custom_call.1} parent=1 // pred_check
      _
    $region23: #{tpu_custom_call.1} parent=1 // pred_check_branch
      %32 = sbr.rel (0) target = $region25
    $region24: #{tpu_custom_call.1} parent=1 // pred_region
      _
    $region25: #{tpu_custom_call.1} parent=1 // pred_fallthru
      _
    // Predicated region
    $region26: #{tpu_custom_call.1} parent=1 // pred_check
      _
    $region27: #{tpu_custom_call.1} parent=1 // pred_check_branch
      %34 = sbr.rel (0) target = $region29
    $region28: #{tpu_custom_call.1} parent=1 // pred_region
      _
    $region29: #{tpu_custom_call.1} parent=1 // pred_fallthru
      _
    // Predicated region
    $region30: #{tpu_custom_call.1} parent=1 // pred_check
      _
    $region31: #{tpu_custom_call.1} parent=1 // pred_check_branch
      %36 = sbr.rel (0) target = $region33
    $region32: #{tpu_custom_call.1} parent=1 // pred_region
      _
    $region33: #{tpu_custom_call.1} parent=1 // pred_fallthru
      _
    // Predicated region
    $region34: #{tpu_custom_call.1} parent=1 // pred_check
      _
    $region35: #{tpu_custom_call.1} parent=1 // pred_check_branch
      %38 = sbr.rel (0) target = $region37
    $region36: #{tpu_custom_call.1} parent=1 // pred_region
      _
    $region37: #{tpu_custom_call.1} parent=1 // pred_fallthru
      _
    // Predicated region
    $region38: #{tpu_custom_call.1} parent=1 // pred_check
      _
    $region39: #{tpu_custom_call.1} parent=1 // pred_check_branch
      %40 = sbr.rel (0) target = $region41
    $region40: #{tpu_custom_call.1} parent=1 // pred_region
      _
    $region41: #{tpu_custom_call.1} parent=1 // pred_fallthru
      _
    // Predicated region
    $region42: #{tpu_custom_call.1} parent=1 // pred_check
      _
    $region43: #{tpu_custom_call.1} parent=1 // pred_check_branch
      %42 = sbr.rel (0) target = $region45
    $region44: #{tpu_custom_call.1} parent=1 // pred_region
      _
    $region45: #{tpu_custom_call.1} parent=1 // pred_fallthru
      _
    // Predicated region
    $region46: #{tpu_custom_call.1} parent=1 // pred_check
      _
    $region47: #{tpu_custom_call.1} parent=1 // pred_check_branch
      %44 = sbr.rel (0) target = $region49
    $region48: #{tpu_custom_call.1} parent=1 // pred_region
      _
    $region49: #{tpu_custom_call.1} parent=1 // pred_fallthru
      _
    // Predicated region
    $region50: #{tpu_custom_call.1} parent=1 // pred_check
      _
    $region51: #{tpu_custom_call.1} parent=1 // pred_check_branch
      %46 = sbr.rel (0) target = $region53
    $region52: #{tpu_custom_call.1} parent=1 // pred_region
      _
    $region53: #{tpu_custom_call.1} parent=1 // pred_fallthru
      _
    %v47 = vld [vmem:[%s0] sm:$0xff]
    %v48 = vld [vmem:[%s0 + $0x8] sm:$0xff]
    %v49 = vld [vmem:[%s1] sm:$0xff]
    %v50 = vld [vmem:[%s1 + $0x8] sm:$0x3]
    %v51 = vld [vmem:[%s2] sm:$0xff]
    %v52 = vld [vmem:[%s2 + $0x8] sm:$0x3]
    %54 = vset.pattern.permute.xlu0 0
    %55 = vperm.xlu0 %54, %v51
    %v56 = vpop.permute.xlu0 %55
    %59 = vset.pattern.permute.xlu0 0
    %60 = vperm.xlu0 %59, %v52
    %v61 = vpop.permute.xlu0 %60
    %vm63 = vcmask 130048
    %v65 = vsel %vm63, %v49, 0
    %v68 = vsel %vm63, %v50, 0
    %70 = vmatprep.subr.mxu0 0.0
    %v71 = vand.u32 %v47, 4294901760
    %72 = vmatpush1.msra.mxu0 %v71
    %73 = vmatprep.subr.mxu0 0.0
    %v74 = vand.u32 %v48, 4294901760
    %75 = vmatpush1.msra.mxu0 %v74
    %76 = vmatprep.subr.mxu0 0.0
    %77 = vmatpush1.msra.mxu0 0.0
    %78 = vmatprep.subr.mxu0 0.0
    %79 = vmatpush1.msra.mxu0 0.0
    %80 = vmatprep.subr.mxu0 0.0
    %81 = vmatpush1.msra.mxu0 0.0
    %82 = vmatprep.subr.mxu0 0.0
    %83 = vmatpush1.msra.mxu0 0.0
    %84 = vmatprep.subr.mxu0 0.0
    %85 = vmatpush1.msra.mxu0 0.0
    %86 = vmatprep.subr.mxu0 0.0
    %87 = vmatpush1.msra.mxu0 0.0
    %88 = vmatprep.subr.mxu0 0.0
    %89 = vmatpush1.msra.mxu0 0.0
    %90 = vmatprep.subr.mxu0 0.0
    %91 = vmatpush1.msra.mxu0 0.0
    %92 = vmatprep.subr.mxu0 0.0
    %93 = vmatpush1.msra.mxu0 0.0
    %94 = vmatprep.subr.mxu0 0.0
    %95 = vmatpush1.msra.mxu0 0.0
    %96 = vmatprep.subr.mxu0 0.0
    %97 = vmatpush1.msra.mxu0 0.0
    %98 = vmatprep.subr.mxu0 0.0
    %99 = vmatpush1.msra.mxu0 0.0
    %100 = vmatprep.subr.mxu0 0.0
    %101 = vmatpush1.msra.mxu0 0.0
    %102 = vmatprep.subr.mxu0 0.0
    %103 = vmatpush1.msra.mxu0 0.0
    %104 = vmatprep.subr.mxu0 0.0
    %105 = vmatpush1.msra.mxu0 0.0
    %106 = vmatprep.subr.mxu0 0.0
    %107 = vmatpush1.msra.mxu0 0.0
    %108 = vmatprep.subr.mxu0 0.0
    %109 = vmatpush1.msra.mxu0 0.0
    %110 = vmatprep.subr.mxu0 0.0
    %111 = vmatpush1.msra.mxu0 0.0
    %112 = vmatprep.subr.mxu0 0.0
    %113 = vmatpush1.msra.mxu0 0.0
    %114 = vmatprep.subr.mxu0 0.0
    %115 = vmatpush1.msra.mxu0 0.0
    %116 = vmatprep.subr.mxu0 0.0
    %117 = vmatpush1.msra.mxu0 0.0
    %118 = vmatprep.subr.mxu0 0.0
    %119 = vmatpush1.msra.mxu0 0.0
    %120 = vmatprep.subr.mxu0 0.0
    %121 = vmatpush1.msra.mxu0 0.0
    %122 = vmatprep.subr.mxu0 0.0
    %123 = vmatpush1.msra.mxu0 0.0
    %124 = vmatprep.subr.mxu0 0.0
    %125 = vmatpush1.msra.mxu0 0.0
    %126 = vmatprep.subr.mxu0 0.0
    %127 = vmatpush1.msra.mxu0 0.0
    %128 = vmatprep.subr.mxu0 0.0
    %129 = vmatpush1.msra.mxu0 0.0
    %130 = vmatprep.subr.mxu0 0.0
    %131 = vmatpush1.msra.mxu0 0.0
    %132 = vmatprep.subr.mxu0 0.0
    %133 = vmatpush1.msra.mxu0 0.0
    %134 = vmatprep.subr.mxu0 0.0
    %135 = vmatpush1.msra.mxu0 0.0
    %136 = vmatprep.mubr.f32.mxu0 0.0
    %v137 = vand.u32 %v65, 4294901760
    %v138 = vsub.f32 %v65, %v137
    %v139 = vand.u32 %v138, 4294901760
    %v140 = vsub.f32 %v138, %v139
    %v141 = vand.u32 %v140, 4294901760
    %142 = vmatmul.mubr.f32.gmra.mrb[0].mxu0 %v141
    %v143 = vpop.f32.mrb[0].mxu0
    %v144 = vadd.f32 %v56, %v143
    %v145 = vpop.f32.mrb[0].mxu0
    %146 = vmatprep.mubr.f32.mxu0 0.0
    %v147 = vand.u32 %v68, 4294901760
    %v148 = vsub.f32 %v68, %v147
    %v149 = vand.u32 %v148, 4294901760
    %v150 = vsub.f32 %v148, %v149
    %v151 = vand.u32 %v150, 4294901760
    %152 = vmatmul.mubr.f32.gmra.mrb[0].mxu0 %v151
    %v153 = vpop.f32.mrb[0].mxu0
    %v154 = vadd.f32 %v61, %v153
    %v155 = vpop.f32.mrb[0].mxu0
    %156 = vdwg.mxu0
    %157 = vmatprep.subr.mxu0 0.0
    %v158 = vand.u32 %v47, 4294901760
    %v159 = vsub.f32 %v47, %v158
    %v160 = vand.u32 %v159, 4294901760
    %v161 = vsub.f32 %v159, %v160
    %v162 = vand.u32 %v161, 4294901760
    %163 = vmatpush1.msra.mxu0 %v162
    %164 = vmatprep.subr.mxu0 0.0
    %v165 = vand.u32 %v48, 4294901760
    %v166 = vsub.f32 %v48, %v165
    %v167 = vand.u32 %v166, 4294901760
    %v168 = vsub.f32 %v166, %v167
    %v169 = vand.u32 %v168, 4294901760
    %170 = vmatpush1.msra.mxu0 %v169
    %171 = vmatprep.subr.mxu0 0.0
    %172 = vmatpush1.msra.mxu0 0.0
    %173 = vmatprep.subr.mxu0 0.0
    %174 = vmatpush1.msra.mxu0 0.0
    %175 = vmatprep.subr.mxu0 0.0
    %176 = vmatpush1.msra.mxu0 0.0
    %177 = vmatprep.subr.mxu0 0.0
    %178 = vmatpush1.msra.mxu0 0.0
    %179 = vmatprep.subr.mxu0 0.0
    %180 = vmatpush1.msra.mxu0 0.0
    %181 = vmatprep.subr.mxu0 0.0
    %182 = vmatpush1.msra.mxu0 0.0
    %183 = vmatprep.subr.mxu0 0.0
    %184 = vmatpush1.msra.mxu0 0.0
    %185 = vmatprep.subr.mxu0 0.0
    %186 = vmatpush1.msra.mxu0 0.0
    %187 = vmatprep.subr.mxu0 0.0
    %188 = vmatpush1.msra.mxu0 0.0
    %189 = vmatprep.subr.mxu0 0.0
    %190 = vmatpush1.msra.mxu0 0.0
    %191 = vmatprep.subr.mxu0 0.0
    %192 = vmatpush1.msra.mxu0 0.0
    %193 = vmatprep.subr.mxu0 0.0
    %194 = vmatpush1.msra.mxu0 0.0
    %195 = vmatprep.subr.mxu0 0.0
    %196 = vmatpush1.msra.mxu0 0.0
    %197 = vmatprep.subr.mxu0 0.0
    %198 = vmatpush1.msra.mxu0 0.0
    %199 = vmatprep.subr.mxu0 0.0
    %200 = vmatpush1.msra.mxu0 0.0
    %201 = vmatprep.subr.mxu0 0.0
    %202 = vmatpush1.msra.mxu0 0.0
    %203 = vmatprep.subr.mxu0 0.0
    %204 = vmatpush1.msra.mxu0 0.0
    %205 = vmatprep.subr.mxu0 0.0
    %206 = vmatpush1.msra.mxu0 0.0
    %207 = vmatprep.subr.mxu0 0.0
    %208 = vmatpush1.msra.mxu0 0.0
    %209 = vmatprep.subr.mxu0 0.0
    %210 = vmatpush1.msra.mxu0 0.0
    %211 = vmatprep.subr.mxu0 0.0
    %212 = vmatpush1.msra.mxu0 0.0
    %213 = vmatprep.subr.mxu0 0.0
    %214 = vmatpush1.msra.mxu0 0.0
    %215 = vmatprep.subr.mxu0 0.0
    %216 = vmatpush1.msra.mxu0 0.0
    %217 = vmatprep.subr.mxu0 0.0
    %218 = vmatpush1.msra.mxu0 0.0
    %219 = vmatprep.subr.mxu0 0.0
    %220 = vmatpush1.msra.mxu0 0.0
    %221 = vmatprep.subr.mxu0 0.0
    %222 = vmatpush1.msra.mxu0 0.0
    %223 = vmatprep.subr.mxu0 0.0
    %224 = vmatpush1.msra.mxu0 0.0
    %225 = vmatprep.subr.mxu0 0.0
    %226 = vmatpush1.msra.mxu0 0.0
    %227 = vmatprep.subr.mxu0 0.0
    %228 = vmatpush1.msra.mxu0 0.0
    %229 = vmatprep.subr.mxu0 0.0
    %230 = vmatpush1.msra.mxu0 0.0
    %231 = vmatprep.mubr.f32.mxu0 0.0
    %v232 = vand.u32 %v65, 4294901760
    %233 = vmatmul.mubr.f32.gmra.mrb[0].mxu0 %v232
    %v234 = vpop.f32.mrb[0].mxu0
    %v235 = vadd.f32 %v144, %v234
    %v236 = vpop.f32.mrb[0].mxu0
    %237 = vmatprep.mubr.f32.mxu0 0.0
    %v238 = vand.u32 %v68, 4294901760
    %239 = vmatmul.mubr.f32.gmra.mrb[0].mxu0 %v238
    %v240 = vpop.f32.mrb[0].mxu0
    %v241 = vadd.f32 %v154, %v240
    %v242 = vpop.f32.mrb[0].mxu0
    %243 = vdwg.mxu0
    %244 = vmatprep.subr.mxu0 0.0
    %v245 = vand.u32 %v47, 4294901760
    %v246 = vsub.f32 %v47, %v245
    %247 = vmatpush1.msra.mxu0 %v246
    %248 = vmatprep.subr.mxu0 0.0
    %v249 = vand.u32 %v48, 4294901760
    %v250 = vsub.f32 %v48, %v249
    %251 = vmatpush1.msra.mxu0 %v250
    %252 = vmatprep.subr.mxu0 0.0
    %253 = vmatpush1.msra.mxu0 0.0
    %254 = vmatprep.subr.mxu0 0.0
    %255 = vmatpush1.msra.mxu0 0.0
    %256 = vmatprep.subr.mxu0 0.0
    %257 = vmatpush1.msra.mxu0 0.0
    %258 = vmatprep.subr.mxu0 0.0
    %259 = vmatpush1.msra.mxu0 0.0
    %260 = vmatprep.subr.mxu0 0.0
    %261 = vmatpush1.msra.mxu0 0.0
    %262 = vmatprep.subr.mxu0 0.0
    %263 = vmatpush1.msra.mxu0 0.0
    %264 = vmatprep.subr.mxu0 0.0
    %265 = vmatpush1.msra.mxu0 0.0
    %266 = vmatprep.subr.mxu0 0.0
    %267 = vmatpush1.msra.mxu0 0.0
    %268 = vmatprep.subr.mxu0 0.0
    %269 = vmatpush1.msra.mxu0 0.0
    %270 = vmatprep.subr.mxu0 0.0
    %271 = vmatpush1.msra.mxu0 0.0
    %272 = vmatprep.subr.mxu0 0.0
    %273 = vmatpush1.msra.mxu0 0.0
    %274 = vmatprep.subr.mxu0 0.0
    %275 = vmatpush1.msra.mxu0 0.0
    %276 = vmatprep.subr.mxu0 0.0
    %277 = vmatpush1.msra.mxu0 0.0
    %278 = vmatprep.subr.mxu0 0.0
    %279 = vmatpush1.msra.mxu0 0.0
    %280 = vmatprep.subr.mxu0 0.0
    %281 = vmatpush1.msra.mxu0 0.0
    %282 = vmatprep.subr.mxu0 0.0
    %283 = vmatpush1.msra.mxu0 0.0
    %284 = vmatprep.subr.mxu0 0.0
    %285 = vmatpush1.msra.mxu0 0.0
    %286 = vmatprep.subr.mxu0 0.0
    %287 = vmatpush1.msra.mxu0 0.0
    %288 = vmatprep.subr.mxu0 0.0
    %289 = vmatpush1.msra.mxu0 0.0
    %290 = vmatprep.subr.mxu0 0.0
    %291 = vmatpush1.msra.mxu0 0.0
    %292 = vmatprep.subr.mxu0 0.0
    %293 = vmatpush1.msra.mxu0 0.0
    %294 = vmatprep.subr.mxu0 0.0
    %295 = vmatpush1.msra.mxu0 0.0
    %296 = vmatprep.subr.mxu0 0.0
    %297 = vmatpush1.msra.mxu0 0.0
    %298 = vmatprep.subr.mxu0 0.0
    %299 = vmatpush1.msra.mxu0 0.0
    %300 = vmatprep.subr.mxu0 0.0
    %301 = vmatpush1.msra.mxu0 0.0
    %302 = vmatprep.subr.mxu0 0.0
    %303 = vmatpush1.msra.mxu0 0.0
    %304 = vmatprep.subr.mxu0 0.0
    %305 = vmatpush1.msra.mxu0 0.0
    %306 = vmatprep.subr.mxu0 0.0
    %307 = vmatpush1.msra.mxu0 0.0
    %308 = vmatprep.subr.mxu0 0.0
    %309 = vmatpush1.msra.mxu0 0.0
    %310 = vmatprep.subr.mxu0 0.0
    %311 = vmatpush1.msra.mxu0 0.0
    %312 = vmatprep.mubr.f32.mxu0 0.0
    %v313 = vand.u32 %v65, 4294901760
    %v314 = vsub.f32 %v65, %v313
    %315 = vmatmul.mubr.f32.gmra.mrb[0].mxu0 %v314
    %v316 = vpop.f32.mrb[0].mxu0
    %v317 = vadd.f32 %v235, %v316
    %v318 = vpop.f32.mrb[0].mxu0
    %319 = vmatprep.mubr.f32.mxu0 0.0
    %v320 = vand.u32 %v68, 4294901760
    %v321 = vsub.f32 %v68, %v320
    %322 = vmatmul.mubr.f32.gmra.mrb[0].mxu0 %v321
    %v323 = vpop.f32.mrb[0].mxu0
    %v324 = vadd.f32 %v241, %v323
    %v325 = vpop.f32.mrb[0].mxu0
    %326 = vdwg.mxu0
    %327 = vmatprep.subr.mxu0 0.0
    %v328 = vand.u32 %v47, 4294901760
    %329 = vmatpush1.msra.mxu0 %v328
    %330 = vmatprep.subr.mxu0 0.0
    %v331 = vand.u32 %v48, 4294901760
    %332 = vmatpush1.msra.mxu0 %v331
    %333 = vmatprep.subr.mxu0 0.0
    %334 = vmatpush1.msra.mxu0 0.0
    %335 = vmatprep.subr.mxu0 0.0
    %336 = vmatpush1.msra.mxu0 0.0
    %337 = vmatprep.subr.mxu0 0.0
    %338 = vmatpush1.msra.mxu0 0.0
    %339 = vmatprep.subr.mxu0 0.0
    %340 = vmatpush1.msra.mxu0 0.0
    %341 = vmatprep.subr.mxu0 0.0
    %342 = vmatpush1.msra.mxu0 0.0
    %343 = vmatprep.subr.mxu0 0.0
    %344 = vmatpush1.msra.mxu0 0.0
    %345 = vmatprep.subr.mxu0 0.0
    %346 = vmatpush1.msra.mxu0 0.0
    %347 = vmatprep.subr.mxu0 0.0
    %348 = vmatpush1.msra.mxu0 0.0
    %349 = vmatprep.subr.mxu0 0.0
    %350 = vmatpush1.msra.mxu0 0.0
    %351 = vmatprep.subr.mxu0 0.0
    %352 = vmatpush1.msra.mxu0 0.0
    %353 = vmatprep.subr.mxu0 0.0
    %354 = vmatpush1.msra.mxu0 0.0
    %355 = vmatprep.subr.mxu0 0.0
    %356 = vmatpush1.msra.mxu0 0.0
    %357 = vmatprep.subr.mxu0 0.0
    %358 = vmatpush1.msra.mxu0 0.0
    %359 = vmatprep.subr.mxu0 0.0
    %360 = vmatpush1.msra.mxu0 0.0
    %361 = vmatprep.subr.mxu0 0.0
    %362 = vmatpush1.msra.mxu0 0.0
    %363 = vmatprep.subr.mxu0 0.0
    %364 = vmatpush1.msra.mxu0 0.0
    %365 = vmatprep.subr.mxu0 0.0
    %366 = vmatpush1.msra.mxu0 0.0
    %367 = vmatprep.subr.mxu0 0.0
    %368 = vmatpush1.msra.mxu0 0.0
    %369 = vmatprep.subr.mxu0 0.0
    %370 = vmatpush1.msra.mxu0 0.0
    %371 = vmatprep.subr.mxu0 0.0
    %372 = vmatpush1.msra.mxu0 0.0
    %373 = vmatprep.subr.mxu0 0.0
    %374 = vmatpush1.msra.mxu0 0.0
    %375 = vmatprep.subr.mxu0 0.0
    %376 = vmatpush1.msra.mxu0 0.0
    %377 = vmatprep.subr.mxu0 0.0
    %378 = vmatpush1.msra.mxu0 0.0
    %379 = vmatprep.subr.mxu0 0.0
    %380 = vmatpush1.msra.mxu0 0.0
    %381 = vmatprep.subr.mxu0 0.0
    %382 = vmatpush1.msra.mxu0 0.0
    %383 = vmatprep.subr.mxu0 0.0
    %384 = vmatpush1.msra.mxu0 0.0
    %385 = vmatprep.subr.mxu0 0.0
    %386 = vmatpush1.msra.mxu0 0.0
    %387 = vmatprep.subr.mxu0 0.0
    %388 = vmatpush1.msra.mxu0 0.0
    %389 = vmatprep.subr.mxu0 0.0
    %390 = vmatpush1.msra.mxu0 0.0
    %391 = vmatprep.subr.mxu0 0.0
    %392 = vmatpush1.msra.mxu0 0.0
    %393 = vmatprep.mubr.f32.mxu0 0.0
    %v394 = vand.u32 %v65, 4294901760
    %v395 = vsub.f32 %v65, %v394
    %v396 = vand.u32 %v395, 4294901760
    %397 = vmatmul.mubr.f32.gmra.mrb[0].mxu0 %v396
    %v398 = vpop.f32.mrb[0].mxu0
    %v399 = vadd.f32 %v317, %v398
    %v400 = vpop.f32.mrb[0].mxu0
    %401 = vmatprep.mubr.f32.mxu0 0.0
    %v402 = vand.u32 %v68, 4294901760
    %v403 = vsub.f32 %v68, %v402
    %v404 = vand.u32 %v403, 4294901760
    %405 = vmatmul.mubr.f32.gmra.mrb[0].mxu0 %v404
    %v406 = vpop.f32.mrb[0].mxu0
    %v407 = vadd.f32 %v324, %v406
    %v408 = vpop.f32.mrb[0].mxu0
    %409 = vdwg.mxu0
    %410 = vmatprep.subr.mxu0 0.0
    %v411 = vand.u32 %v47, 4294901760
    %v412 = vsub.f32 %v47, %v411
    %v413 = vand.u32 %v412, 4294901760
    %414 = vmatpush1.msra.mxu0 %v413
    %415 = vmatprep.subr.mxu0 0.0
    %v416 = vand.u32 %v48, 4294901760
    %v417 = vsub.f32 %v48, %v416
    %v418 = vand.u32 %v417, 4294901760
    %419 = vmatpush1.msra.mxu0 %v418
    %420 = vmatprep.subr.mxu0 0.0
    %421 = vmatpush1.msra.mxu0 0.0
    %422 = vmatprep.subr.mxu0 0.0
    %423 = vmatpush1.msra.mxu0 0.0
    %424 = vmatprep.subr.mxu0 0.0
    %425 = vmatpush1.msra.mxu0 0.0
    %426 = vmatprep.subr.mxu0 0.0
    %427 = vmatpush1.msra.mxu0 0.0
    %428 = vmatprep.subr.mxu0 0.0
    %429 = vmatpush1.msra.mxu0 0.0
    %430 = vmatprep.subr.mxu0 0.0
    %431 = vmatpush1.msra.mxu0 0.0
    %432 = vmatprep.subr.mxu0 0.0
    %433 = vmatpush1.msra.mxu0 0.0
    %434 = vmatprep.subr.mxu0 0.0
    %435 = vmatpush1.msra.mxu0 0.0
    %436 = vmatprep.subr.mxu0 0.0
    %437 = vmatpush1.msra.mxu0 0.0
    %438 = vmatprep.subr.mxu0 0.0
    %439 = vmatpush1.msra.mxu0 0.0
    %440 = vmatprep.subr.mxu0 0.0
    %441 = vmatpush1.msra.mxu0 0.0
    %442 = vmatprep.subr.mxu0 0.0
    %443 = vmatpush1.msra.mxu0 0.0
    %444 = vmatprep.subr.mxu0 0.0
    %445 = vmatpush1.msra.mxu0 0.0
    %446 = vmatprep.subr.mxu0 0.0
    %447 = vmatpush1.msra.mxu0 0.0
    %448 = vmatprep.subr.mxu0 0.0
    %449 = vmatpush1.msra.mxu0 0.0
    %450 = vmatprep.subr.mxu0 0.0
    %451 = vmatpush1.msra.mxu0 0.0
    %452 = vmatprep.subr.mxu0 0.0
    %453 = vmatpush1.msra.mxu0 0.0
    %454 = vmatprep.subr.mxu0 0.0
    %455 = vmatpush1.msra.mxu0 0.0
    %456 = vmatprep.subr.mxu0 0.0
    %457 = vmatpush1.msra.mxu0 0.0
    %458 = vmatprep.subr.mxu0 0.0
    %459 = vmatpush1.msra.mxu0 0.0
    %460 = vmatprep.subr.mxu0 0.0
    %461 = vmatpush1.msra.mxu0 0.0
    %462 = vmatprep.subr.mxu0 0.0
    %463 = vmatpush1.msra.mxu0 0.0
    %464 = vmatprep.subr.mxu0 0.0
    %465 = vmatpush1.msra.mxu0 0.0
    %466 = vmatprep.subr.mxu0 0.0
    %467 = vmatpush1.msra.mxu0 0.0
    %468 = vmatprep.subr.mxu0 0.0
    %469 = vmatpush1.msra.mxu0 0.0
    %470 = vmatprep.subr.mxu0 0.0
    %471 = vmatpush1.msra.mxu0 0.0
    %472 = vmatprep.subr.mxu0 0.0
    %473 = vmatpush1.msra.mxu0 0.0
    %474 = vmatprep.subr.mxu0 0.0
    %475 = vmatpush1.msra.mxu0 0.0
    %476 = vmatprep.subr.mxu0 0.0
    %477 = vmatpush1.msra.mxu0 0.0
    %478 = vmatprep.subr.mxu0 0.0
    %479 = vmatpush1.msra.mxu0 0.0
    %480 = vmatprep.mubr.f32.mxu0 0.0
    %v481 = vand.u32 %v65, 4294901760
    %482 = vmatmul.mubr.f32.gmra.mrb[0].mxu0 %v481
    %v483 = vpop.f32.mrb[0].mxu0
    %v484 = vadd.f32 %v399, %v483
    %v485 = vpop.f32.mrb[0].mxu0
    %486 = vmatprep.mubr.f32.mxu0 0.0
    %v487 = vand.u32 %v68, 4294901760
    %488 = vmatmul.mubr.f32.gmra.mrb[0].mxu0 %v487
    %v489 = vpop.f32.mrb[0].mxu0
    %v490 = vadd.f32 %v407, %v489
    %v491 = vpop.f32.mrb[0].mxu0
    %492 = vdwg.mxu0
    %493 = vmatprep.subr.mxu0 0.0
    %v494 = vand.u32 %v47, 4294901760
    %495 = vmatpush1.msra.mxu0 %v494
    %496 = vmatprep.subr.mxu0 0.0
    %v497 = vand.u32 %v48, 4294901760
    %498 = vmatpush1.msra.mxu0 %v497
    %499 = vmatprep.subr.mxu0 0.0
    %500 = vmatpush1.msra.mxu0 0.0
    %501 = vmatprep.subr.mxu0 0.0
    %502 = vmatpush1.msra.mxu0 0.0
    %503 = vmatprep.subr.mxu0 0.0
    %504 = vmatpush1.msra.mxu0 0.0
    %505 = vmatprep.subr.mxu0 0.0
    %506 = vmatpush1.msra.mxu0 0.0
    %507 = vmatprep.subr.mxu0 0.0
    %508 = vmatpush1.msra.mxu0 0.0
    %509 = vmatprep.subr.mxu0 0.0
    %510 = vmatpush1.msra.mxu0 0.0
    %511 = vmatprep.subr.mxu0 0.0
    %512 = vmatpush1.msra.mxu0 0.0
    %513 = vmatprep.subr.mxu0 0.0
    %514 = vmatpush1.msra.mxu0 0.0
    %515 = vmatprep.subr.mxu0 0.0
    %516 = vmatpush1.msra.mxu0 0.0
    %517 = vmatprep.subr.mxu0 0.0
    %518 = vmatpush1.msra.mxu0 0.0
    %519 = vmatprep.subr.mxu0 0.0
    %520 = vmatpush1.msra.mxu0 0.0
    %521 = vmatprep.subr.mxu0 0.0
    %522 = vmatpush1.msra.mxu0 0.0
    %523 = vmatprep.subr.mxu0 0.0
    %524 = vmatpush1.msra.mxu0 0.0
    %525 = vmatprep.subr.mxu0 0.0
    %526 = vmatpush1.msra.mxu0 0.0
    %527 = vmatprep.subr.mxu0 0.0
    %528 = vmatpush1.msra.mxu0 0.0
    %529 = vmatprep.subr.mxu0 0.0
    %530 = vmatpush1.msra.mxu0 0.0
    %531 = vmatprep.subr.mxu0 0.0
    %532 = vmatpush1.msra.mxu0 0.0
    %533 = vmatprep.subr.mxu0 0.0
    %534 = vmatpush1.msra.mxu0 0.0
    %535 = vmatprep.subr.mxu0 0.0
    %536 = vmatpush1.msra.mxu0 0.0
    %537 = vmatprep.subr.mxu0 0.0
    %538 = vmatpush1.msra.mxu0 0.0
    %539 = vmatprep.subr.mxu0 0.0
    %540 = vmatpush1.msra.mxu0 0.0
    %541 = vmatprep.subr.mxu0 0.0
    %542 = vmatpush1.msra.mxu0 0.0
    %543 = vmatprep.subr.mxu0 0.0
    %544 = vmatpush1.msra.mxu0 0.0
    %545 = vmatprep.subr.mxu0 0.0
    %546 = vmatpush1.msra.mxu0 0.0
    %547 = vmatprep.subr.mxu0 0.0
    %548 = vmatpush1.msra.mxu0 0.0
    %549 = vmatprep.subr.mxu0 0.0
    %550 = vmatpush1.msra.mxu0 0.0
    %551 = vmatprep.subr.mxu0 0.0
    %552 = vmatpush1.msra.mxu0 0.0
    %553 = vmatprep.subr.mxu0 0.0
    %554 = vmatpush1.msra.mxu0 0.0
    %555 = vmatprep.subr.mxu0 0.0
    %556 = vmatpush1.msra.mxu0 0.0
    %557 = vmatprep.subr.mxu0 0.0
    %558 = vmatpush1.msra.mxu0 0.0
    %559 = vmatprep.mubr.f32.mxu0 0.0
    %v560 = vand.u32 %v65, 4294901760
    %561 = vmatmul.mubr.f32.gmra.mrb[0].mxu0 %v560
    %v562 = vpop.f32.mrb[0].mxu0
    %v563 = vadd.f32 %v484, %v562
    %v564 = vpop.f32.mrb[0].mxu0
    %565 = vmatprep.mubr.f32.mxu0 0.0
    %v566 = vand.u32 %v68, 4294901760
    %567 = vmatmul.mubr.f32.gmra.mrb[0].mxu0 %v566
    %v568 = vpop.f32.mrb[0].mxu0
    %v569 = vadd.f32 %v490, %v568
    %v570 = vpop.f32.mrb[0].mxu0
    %571 = vdwg.mxu0
    %v572 = vmax.f32 %v563, 0.0
    %v573 = vmax.f32 %v569, 0.0
    %v574 = vld [vmem:[%s3] sm:$0x1f]
    %v575 = vld [vmem:[%s4] sm:$0x1f]
    %577 = vset.pattern.permute.xlu0 0
    %578 = vperm.xlu0 %577, %v575
    %v579 = vpop.permute.xlu0 %578
    %vm581 = vcmask 80896
    %v583 = vsel %vm581, %v574, 0
    %vm585 = vcmask 1041408
    %v587 = vsel %vm585, %v573, 0
    %589 = vmatprep.subr.mxu0 0.0
    %v590 = vand.u32 %v572, 4294901760
    %591 = vmatpush1.msra.mxu0 %v590
    %592 = vmatprep.subr.mxu0 0.0
    %v593 = vand.u32 %v587, 4294901760
    %594 = vmatpush1.msra.mxu0 %v593
    %595 = vmatprep.subr.mxu0 0.0
    %596 = vmatpush1.msra.mxu0 0.0
    %597 = vmatprep.subr.mxu0 0.0
    %598 = vmatpush1.msra.mxu0 0.0
    %599 = vmatprep.subr.mxu0 0.0
    %600 = vmatpush1.msra.mxu0 0.0
    %601 = vmatprep.subr.mxu0 0.0
    %602 = vmatpush1.msra.mxu0 0.0
    %603 = vmatprep.subr.mxu0 0.0
    %604 = vmatpush1.msra.mxu0 0.0
    %605 = vmatprep.subr.mxu0 0.0
    %606 = vmatpush1.msra.mxu0 0.0
    %607 = vmatprep.subr.mxu0 0.0
    %608 = vmatpush1.msra.mxu0 0.0
    %609 = vmatprep.subr.mxu0 0.0
    %610 = vmatpush1.msra.mxu0 0.0
    %611 = vmatprep.subr.mxu0 0.0
    %612 = vmatpush1.msra.mxu0 0.0
    %613 = vmatprep.subr.mxu0 0.0
    %614 = vmatpush1.msra.mxu0 0.0
    %615 = vmatprep.subr.mxu0 0.0
    %616 = vmatpush1.msra.mxu0 0.0
    %617 = vmatprep.subr.mxu0 0.0
    %618 = vmatpush1.msra.mxu0 0.0
    %619 = vmatprep.subr.mxu0 0.0
    %620 = vmatpush1.msra.mxu0 0.0
    %621 = vmatprep.subr.mxu0 0.0
    %622 = vmatpush1.msra.mxu0 0.0
    %623 = vmatprep.subr.mxu0 0.0
    %624 = vmatpush1.msra.mxu0 0.0
    %625 = vmatprep.subr.mxu0 0.0
    %626 = vmatpush1.msra.mxu0 0.0
    %627 = vmatprep.subr.mxu0 0.0
    %628 = vmatpush1.msra.mxu0 0.0
    %629 = vmatprep.subr.mxu0 0.0
    %630 = vmatpush1.msra.mxu0 0.0
    %631 = vmatprep.subr.mxu0 0.0
    %632 = vmatpush1.msra.mxu0 0.0
    %633 = vmatprep.subr.mxu0 0.0
    %634 = vmatpush1.msra.mxu0 0.0
    %635 = vmatprep.subr.mxu0 0.0
    %636 = vmatpush1.msra.mxu0 0.0
    %637 = vmatprep.subr.mxu0 0.0
    %638 = vmatpush1.msra.mxu0 0.0
    %639 = vmatprep.subr.mxu0 0.0
    %640 = vmatpush1.msra.mxu0 0.0
    %641 = vmatprep.subr.mxu0 0.0
    %642 = vmatpush1.msra.mxu0 0.0
    %643 = vmatprep.subr.mxu0 0.0
    %644 = vmatpush1.msra.mxu0 0.0
    %645 = vmatprep.subr.mxu0 0.0
    %646 = vmatpush1.msra.mxu0 0.0
    %647 = vmatprep.subr.mxu0 0.0
    %648 = vmatpush1.msra.mxu0 0.0
    %649 = vmatprep.subr.mxu0 0.0
    %650 = vmatpush1.msra.mxu0 0.0
    %651 = vmatprep.subr.mxu0 0.0
    %652 = vmatpush1.msra.mxu0 0.0
    %653 = vmatprep.subr.mxu0 0.0
    %654 = vmatpush1.msra.mxu0 0.0
    %655 = vmatprep.mubr.f32.mxu0 0.0
    %v656 = vand.u32 %v583, 4294901760
    %v657 = vsub.f32 %v583, %v656
    %v658 = vand.u32 %v657, 4294901760
    %v659 = vsub.f32 %v657, %v658
    %v660 = vand.u32 %v659, 4294901760
    %661 = vmatmul.mubr.f32.gmra.mrb[0].mxu0 %v660
    %v662 = vpop.f32.mrb[0].mxu0
    %v663 = vadd.f32 %v579, %v662
    %v664 = vpop.f32.mrb[0].mxu0
    %665 = vdwg.mxu0
    %666 = vmatprep.subr.mxu0 0.0
    %v667 = vand.u32 %v572, 4294901760
    %v668 = vsub.f32 %v572, %v667
    %v669 = vand.u32 %v668, 4294901760
    %v670 = vsub.f32 %v668, %v669
    %v671 = vand.u32 %v670, 4294901760
    %672 = vmatpush1.msra.mxu0 %v671
    %673 = vmatprep.subr.mxu0 0.0
    %v674 = vand.u32 %v587, 4294901760
    %v675 = vsub.f32 %v587, %v674
    %v676 = vand.u32 %v675, 4294901760
    %v677 = vsub.f32 %v675, %v676
    %v678 = vand.u32 %v677, 4294901760
    %679 = vmatpush1.msra.mxu0 %v678
    %680 = vmatprep.subr.mxu0 0.0
    %681 = vmatpush1.msra.mxu0 0.0
    %682 = vmatprep.subr.mxu0 0.0
    %683 = vmatpush1.msra.mxu0 0.0
    %684 = vmatprep.subr.mxu0 0.0
    %685 = vmatpush1.msra.mxu0 0.0
    %686 = vmatprep.subr.mxu0 0.0
    %687 = vmatpush1.msra.mxu0 0.0
    %688 = vmatprep.subr.mxu0 0.0
    %689 = vmatpush1.msra.mxu0 0.0
    %690 = vmatprep.subr.mxu0 0.0
    %691 = vmatpush1.msra.mxu0 0.0
    %692 = vmatprep.subr.mxu0 0.0
    %693 = vmatpush1.msra.mxu0 0.0
    %694 = vmatprep.subr.mxu0 0.0
    %695 = vmatpush1.msra.mxu0 0.0
    %696 = vmatprep.subr.mxu0 0.0
    %697 = vmatpush1.msra.mxu0 0.0
    %698 = vmatprep.subr.mxu0 0.0
    %699 = vmatpush1.msra.mxu0 0.0
    %700 = vmatprep.subr.mxu0 0.0
    %701 = vmatpush1.msra.mxu0 0.0
    %702 = vmatprep.subr.mxu0 0.0
    %703 = vmatpush1.msra.mxu0 0.0
    %704 = vmatprep.subr.mxu0 0.0
    %705 = vmatpush1.msra.mxu0 0.0
    %706 = vmatprep.subr.mxu0 0.0
    %707 = vmatpush1.msra.mxu0 0.0
    %708 = vmatprep.subr.mxu0 0.0
    %709 = vmatpush1.msra.mxu0 0.0
    %710 = vmatprep.subr.mxu0 0.0
    %711 = vmatpush1.msra.mxu0 0.0
    %712 = vmatprep.subr.mxu0 0.0
    %713 = vmatpush1.msra.mxu0 0.0
    %714 = vmatprep.subr.mxu0 0.0
    %715 = vmatpush1.msra.mxu0 0.0
    %716 = vmatprep.subr.mxu0 0.0
    %717 = vmatpush1.msra.mxu0 0.0
    %718 = vmatprep.subr.mxu0 0.0
    %719 = vmatpush1.msra.mxu0 0.0
    %720 = vmatprep.subr.mxu0 0.0
    %721 = vmatpush1.msra.mxu0 0.0
    %722 = vmatprep.subr.mxu0 0.0
    %723 = vmatpush1.msra.mxu0 0.0
    %724 = vmatprep.subr.mxu0 0.0
    %725 = vmatpush1.msra.mxu0 0.0
    %726 = vmatprep.subr.mxu0 0.0
    %727 = vmatpush1.msra.mxu0 0.0
    %728 = vmatprep.subr.mxu0 0.0
    %729 = vmatpush1.msra.mxu0 0.0
    %730 = vmatprep.subr.mxu0 0.0
    %731 = vmatpush1.msra.mxu0 0.0
    %732 = vmatprep.subr.mxu0 0.0
    %733 = vmatpush1.msra.mxu0 0.0
    %734 = vmatprep.subr.mxu0 0.0
    %735 = vmatpush1.msra.mxu0 0.0
    %736 = vmatprep.subr.mxu0 0.0
    %737 = vmatpush1.msra.mxu0 0.0
    %738 = vmatprep.subr.mxu0 0.0
    %739 = vmatpush1.msra.mxu0 0.0
    %740 = vmatprep.mubr.f32.mxu0 0.0
    %v741 = vand.u32 %v583, 4294901760
    %742 = vmatmul.mubr.f32.gmra.mrb[0].mxu0 %v741
    %v743 = vpop.f32.mrb[0].mxu0
    %v744 = vadd.f32 %v663, %v743
    %v745 = vpop.f32.mrb[0].mxu0
    %746 = vdwg.mxu0
    %747 = vmatprep.subr.mxu0 0.0
    %v748 = vand.u32 %v572, 4294901760
    %v749 = vsub.f32 %v572, %v748
    %750 = vmatpush1.msra.mxu0 %v749
    %751 = vmatprep.subr.mxu0 0.0
    %v752 = vand.u32 %v587, 4294901760
    %v753 = vsub.f32 %v587, %v752
    %754 = vmatpush1.msra.mxu0 %v753
    %755 = vmatprep.subr.mxu0 0.0
    %756 = vmatpush1.msra.mxu0 0.0
    %757 = vmatprep.subr.mxu0 0.0
    %758 = vmatpush1.msra.mxu0 0.0
    %759 = vmatprep.subr.mxu0 0.0
    %760 = vmatpush1.msra.mxu0 0.0
    %761 = vmatprep.subr.mxu0 0.0
    %762 = vmatpush1.msra.mxu0 0.0
    %763 = vmatprep.subr.mxu0 0.0
    %764 = vmatpush1.msra.mxu0 0.0
    %765 = vmatprep.subr.mxu0 0.0
    %766 = vmatpush1.msra.mxu0 0.0
    %767 = vmatprep.subr.mxu0 0.0
    %768 = vmatpush1.msra.mxu0 0.0
    %769 = vmatprep.subr.mxu0 0.0
    %770 = vmatpush1.msra.mxu0 0.0
    %771 = vmatprep.subr.mxu0 0.0
    %772 = vmatpush1.msra.mxu0 0.0
    %773 = vmatprep.subr.mxu0 0.0
    %774 = vmatpush1.msra.mxu0 0.0
    %775 = vmatprep.subr.mxu0 0.0
    %776 = vmatpush1.msra.mxu0 0.0
    %777 = vmatprep.subr.mxu0 0.0
    %778 = vmatpush1.msra.mxu0 0.0
    %779 = vmatprep.subr.mxu0 0.0
    %780 = vmatpush1.msra.mxu0 0.0
    %781 = vmatprep.subr.mxu0 0.0
    %782 = vmatpush1.msra.mxu0 0.0
    %783 = vmatprep.subr.mxu0 0.0
    %784 = vmatpush1.msra.mxu0 0.0
    %785 = vmatprep.subr.mxu0 0.0
    %786 = vmatpush1.msra.mxu0 0.0
    %787 = vmatprep.subr.mxu0 0.0
    %788 = vmatpush1.msra.mxu0 0.0
    %789 = vmatprep.subr.mxu0 0.0
    %790 = vmatpush1.msra.mxu0 0.0
    %791 = vmatprep.subr.mxu0 0.0
    %792 = vmatpush1.msra.mxu0 0.0
    %793 = vmatprep.subr.mxu0 0.0
    %794 = vmatpush1.msra.mxu0 0.0
    %795 = vmatprep.subr.mxu0 0.0
    %796 = vmatpush1.msra.mxu0 0.0
    %797 = vmatprep.subr.mxu0 0.0
    %798 = vmatpush1.msra.mxu0 0.0
    %799 = vmatprep.subr.mxu0 0.0
    %800 = vmatpush1.msra.mxu0 0.0
    %801 = vmatprep.subr.mxu0 0.0
    %802 = vmatpush1.msra.mxu0 0.0
    %803 = vmatprep.subr.mxu0 0.0
    %804 = vmatpush1.msra.mxu0 0.0
    %805 = vmatprep.subr.mxu0 0.0
    %806 = vmatpush1.msra.mxu0 0.0
    %807 = vmatprep.subr.mxu0 0.0
    %808 = vmatpush1.msra.mxu0 0.0
    %809 = vmatprep.subr.mxu0 0.0
    %810 = vmatpush1.msra.mxu0 0.0
    %811 = vmatprep.subr.mxu0 0.0
    %812 = vmatpush1.msra.mxu0 0.0
    %813 = vmatprep.subr.mxu0 0.0
    %814 = vmatpush1.msra.mxu0 0.0
    %815 = vmatprep.mubr.f32.mxu0 0.0
    %v816 = vand.u32 %v583, 4294901760
    %v817 = vsub.f32 %v583, %v816
    %818 = vmatmul.mubr.f32.gmra.mrb[0].mxu0 %v817
    %v819 = vpop.f32.mrb[0].mxu0
    %v820 = vadd.f32 %v744, %v819
    %v821 = vpop.f32.mrb[0].mxu0
    %822 = vdwg.mxu0
    %823 = vmatprep.subr.mxu0 0.0
    %v824 = vand.u32 %v572, 4294901760
    %825 = vmatpush1.msra.mxu0 %v824
    %826 = vmatprep.subr.mxu0 0.0
    %v827 = vand.u32 %v587, 4294901760
    %828 = vmatpush1.msra.mxu0 %v827
    %829 = vmatprep.subr.mxu0 0.0
    %830 = vmatpush1.msra.mxu0 0.0
    %831 = vmatprep.subr.mxu0 0.0
    %832 = vmatpush1.msra.mxu0 0.0
    %833 = vmatprep.subr.mxu0 0.0
    %834 = vmatpush1.msra.mxu0 0.0
    %835 = vmatprep.subr.mxu0 0.0
    %836 = vmatpush1.msra.mxu0 0.0
    %837 = vmatprep.subr.mxu0 0.0
    %838 = vmatpush1.msra.mxu0 0.0
    %839 = vmatprep.subr.mxu0 0.0
    %840 = vmatpush1.msra.mxu0 0.0
    %841 = vmatprep.subr.mxu0 0.0
    %842 = vmatpush1.msra.mxu0 0.0
    %843 = vmatprep.subr.mxu0 0.0
    %844 = vmatpush1.msra.mxu0 0.0
    %845 = vmatprep.subr.mxu0 0.0
    %846 = vmatpush1.msra.mxu0 0.0
    %847 = vmatprep.subr.mxu0 0.0
    %848 = vmatpush1.msra.mxu0 0.0
    %849 = vmatprep.subr.mxu0 0.0
    %850 = vmatpush1.msra.mxu0 0.0
    %851 = vmatprep.subr.mxu0 0.0
    %852 = vmatpush1.msra.mxu0 0.0
    %853 = vmatprep.subr.mxu0 0.0
    %854 = vmatpush1.msra.mxu0 0.0
    %855 = vmatprep.subr.mxu0 0.0
    %856 = vmatpush1.msra.mxu0 0.0
    %857 = vmatprep.subr.mxu0 0.0
    %858 = vmatpush1.msra.mxu0 0.0
    %859 = vmatprep.subr.mxu0 0.0
    %860 = vmatpush1.msra.mxu0 0.0
    %861 = vmatprep.subr.mxu0 0.0
    %862 = vmatpush1.msra.mxu0 0.0
    %863 = vmatprep.subr.mxu0 0.0
    %864 = vmatpush1.msra.mxu0 0.0
    %865 = vmatprep.subr.mxu0 0.0
    %866 = vmatpush1.msra.mxu0 0.0
    %867 = vmatprep.subr.mxu0 0.0
    %868 = vmatpush1.msra.mxu0 0.0
    %869 = vmatprep.subr.mxu0 0.0
    %870 = vmatpush1.msra.mxu0 0.0
    %871 = vmatprep.subr.mxu0 0.0
    %872 = vmatpush1.msra.mxu0 0.0
    %873 = vmatprep.subr.mxu0 0.0
    %874 = vmatpush1.msra.mxu0 0.0
    %875 = vmatprep.subr.mxu0 0.0
    %876 = vmatpush1.msra.mxu0 0.0
    %877 = vmatprep.subr.mxu0 0.0
    %878 = vmatpush1.msra.mxu0 0.0
    %879 = vmatprep.subr.mxu0 0.0
    %880 = vmatpush1.msra.mxu0 0.0
    %881 = vmatprep.subr.mxu0 0.0
    %882 = vmatpush1.msra.mxu0 0.0
    %883 = vmatprep.subr.mxu0 0.0
    %884 = vmatpush1.msra.mxu0 0.0
    %885 = vmatprep.subr.mxu0 0.0
    %886 = vmatpush1.msra.mxu0 0.0
    %887 = vmatprep.subr.mxu0 0.0
    %888 = vmatpush1.msra.mxu0 0.0
    %889 = vmatprep.mubr.f32.mxu0 0.0
    %v890 = vand.u32 %v583, 4294901760
    %v891 = vsub.f32 %v583, %v890
    %v892 = vand.u32 %v891, 4294901760
    %893 = vmatmul.mubr.f32.gmra.mrb[0].mxu0 %v892
    %v894 = vpop.f32.mrb[0].mxu0
    %v895 = vadd.f32 %v820, %v894
    %v896 = vpop.f32.mrb[0].mxu0
    %897 = vdwg.mxu0
    %898 = vmatprep.subr.mxu0 0.0
    %v899 = vand.u32 %v572, 4294901760
    %v900 = vsub.f32 %v572, %v899
    %v901 = vand.u32 %v900, 4294901760
    %902 = vmatpush1.msra.mxu0 %v901
    %903 = vmatprep.subr.mxu0 0.0
    %v904 = vand.u32 %v587, 4294901760
    %v905 = vsub.f32 %v587, %v904
    %v906 = vand.u32 %v905, 4294901760
    %907 = vmatpush1.msra.mxu0 %v906
    %908 = vmatprep.subr.mxu0 0.0
    %909 = vmatpush1.msra.mxu0 0.0
    %910 = vmatprep.subr.mxu0 0.0
    %911 = vmatpush1.msra.mxu0 0.0
    %912 = vmatprep.subr.mxu0 0.0
    %913 = vmatpush1.msra.mxu0 0.0
    %914 = vmatprep.subr.mxu0 0.0
    %915 = vmatpush1.msra.mxu0 0.0
    %916 = vmatprep.subr.mxu0 0.0
    %917 = vmatpush1.msra.mxu0 0.0
    %918 = vmatprep.subr.mxu0 0.0
    %919 = vmatpush1.msra.mxu0 0.0
    %920 = vmatprep.subr.mxu0 0.0
    %921 = vmatpush1.msra.mxu0 0.0
    %922 = vmatprep.subr.mxu0 0.0
    %923 = vmatpush1.msra.mxu0 0.0
    %924 = vmatprep.subr.mxu0 0.0
    %925 = vmatpush1.msra.mxu0 0.0
    %926 = vmatprep.subr.mxu0 0.0
    %927 = vmatpush1.msra.mxu0 0.0
    %928 = vmatprep.subr.mxu0 0.0
    %929 = vmatpush1.msra.mxu0 0.0
    %930 = vmatprep.subr.mxu0 0.0
    %931 = vmatpush1.msra.mxu0 0.0
    %932 = vmatprep.subr.mxu0 0.0
    %933 = vmatpush1.msra.mxu0 0.0
    %934 = vmatprep.subr.mxu0 0.0
    %935 = vmatpush1.msra.mxu0 0.0
    %936 = vmatprep.subr.mxu0 0.0
    %937 = vmatpush1.msra.mxu0 0.0
    %938 = vmatprep.subr.mxu0 0.0
    %939 = vmatpush1.msra.mxu0 0.0
    %940 = vmatprep.subr.mxu0 0.0
    %941 = vmatpush1.msra.mxu0 0.0
    %942 = vmatprep.subr.mxu0 0.0
    %943 = vmatpush1.msra.mxu0 0.0
    %944 = vmatprep.subr.mxu0 0.0
    %945 = vmatpush1.msra.mxu0 0.0
    %946 = vmatprep.subr.mxu0 0.0
    %947 = vmatpush1.msra.mxu0 0.0
    %948 = vmatprep.subr.mxu0 0.0
    %949 = vmatpush1.msra.mxu0 0.0
    %950 = vmatprep.subr.mxu0 0.0
    %951 = vmatpush1.msra.mxu0 0.0
    %952 = vmatprep.subr.mxu0 0.0
    %953 = vmatpush1.msra.mxu0 0.0
    %954 = vmatprep.subr.mxu0 0.0
    %955 = vmatpush1.msra.mxu0 0.0
    %956 = vmatprep.subr.mxu0 0.0
    %957 = vmatpush1.msra.mxu0 0.0
    %958 = vmatprep.subr.mxu0 0.0
    %959 = vmatpush1.msra.mxu0 0.0
    %960 = vmatprep.subr.mxu0 0.0
    %961 = vmatpush1.msra.mxu0 0.0
    %962 = vmatprep.subr.mxu0 0.0
    %963 = vmatpush1.msra.mxu0 0.0
    %964 = vmatprep.subr.mxu0 0.0
    %965 = vmatpush1.msra.mxu0 0.0
    %966 = vmatprep.subr.mxu0 0.0
    %967 = vmatpush1.msra.mxu0 0.0
    %968 = vmatprep.mubr.f32.mxu0 0.0
    %v969 = vand.u32 %v583, 4294901760
    %970 = vmatmul.mubr.f32.gmra.mrb[0].mxu0 %v969
    %v971 = vpop.f32.mrb[0].mxu0
    %v972 = vadd.f32 %v895, %v971
    %v973 = vpop.f32.mrb[0].mxu0
    %974 = vdwg.mxu0
    %975 = vmatprep.subr.mxu0 0.0
    %v976 = vand.u32 %v572, 4294901760
    %977 = vmatpush1.msra.mxu0 %v976
    %978 = vmatprep.subr.mxu0 0.0
    %v979 = vand.u32 %v587, 4294901760
    %980 = vmatpush1.msra.mxu0 %v979
    %981 = vmatprep.subr.mxu0 0.0
    %982 = vmatpush1.msra.mxu0 0.0
    %983 = vmatprep.subr.mxu0 0.0
    %984 = vmatpush1.msra.mxu0 0.0
    %985 = vmatprep.subr.mxu0 0.0
    %986 = vmatpush1.msra.mxu0 0.0
    %987 = vmatprep.subr.mxu0 0.0
    %988 = vmatpush1.msra.mxu0 0.0
    %989 = vmatprep.subr.mxu0 0.0
    %990 = vmatpush1.msra.mxu0 0.0
    %991 = vmatprep.subr.mxu0 0.0
    %992 = vmatpush1.msra.mxu0 0.0
    %993 = vmatprep.subr.mxu0 0.0
    %994 = vmatpush1.msra.mxu0 0.0
    %995 = vmatprep.subr.mxu0 0.0
    %996 = vmatpush1.msra.mxu0 0.0
    %997 = vmatprep.subr.mxu0 0.0
    %998 = vmatpush1.msra.mxu0 0.0
    %999 = vmatprep.subr.mxu0 0.0
    %1000 = vmatpush1.msra.mxu0 0.0
    %1001 = vmatprep.subr.mxu0 0.0
    %1002 = vmatpush1.msra.mxu0 0.0
    %1003 = vmatprep.subr.mxu0 0.0
    %1004 = vmatpush1.msra.mxu0 0.0
    %1005 = vmatprep.subr.mxu0 0.0
    %1006 = vmatpush1.msra.mxu0 0.0
    %1007 = vmatprep.subr.mxu0 0.0
    %1008 = vmatpush1.msra.mxu0 0.0
    %1009 = vmatprep.subr.mxu0 0.0
    %1010 = vmatpush1.msra.mxu0 0.0
    %1011 = vmatprep.subr.mxu0 0.0
    %1012 = vmatpush1.msra.mxu0 0.0
    %1013 = vmatprep.subr.mxu0 0.0
    %1014 = vmatpush1.msra.mxu0 0.0
    %1015 = vmatprep.subr.mxu0 0.0
    %1016 = vmatpush1.msra.mxu0 0.0
    %1017 = vmatprep.subr.mxu0 0.0
    %1018 = vmatpush1.msra.mxu0 0.0
    %1019 = vmatprep.subr.mxu0 0.0
    %1020 = vmatpush1.msra.mxu0 0.0
    %1021 = vmatprep.subr.mxu0 0.0
    %1022 = vmatpush1.msra.mxu0 0.0
    %1023 = vmatprep.subr.mxu0 0.0
    %1024 = vmatpush1.msra.mxu0 0.0
    %1025 = vmatprep.subr.mxu0 0.0
    %1026 = vmatpush1.msra.mxu0 0.0
    %1027 = vmatprep.subr.mxu0 0.0
    %1028 = vmatpush1.msra.mxu0 0.0
    %1029 = vmatprep.subr.mxu0 0.0
    %1030 = vmatpush1.msra.mxu0 0.0
    %1031 = vmatprep.subr.mxu0 0.0
    %1032 = vmatpush1.msra.mxu0 0.0
    %1033 = vmatprep.subr.mxu0 0.0
    %1034 = vmatpush1.msra.mxu0 0.0
    %1035 = vmatprep.subr.mxu0 0.0
    %1036 = vmatpush1.msra.mxu0 0.0
    %1037 = vmatprep.subr.mxu0 0.0
    %1038 = vmatpush1.msra.mxu0 0.0
    %1039 = vmatprep.subr.mxu0 0.0
    %1040 = vmatpush1.msra.mxu0 0.0
    %1041 = vmatprep.mubr.f32.mxu0 0.0
    %v1042 = vand.u32 %v583, 4294901760
    %1043 = vmatmul.mubr.f32.gmra.mrb[0].mxu0 %v1042
    %v1044 = vpop.f32.mrb[0].mxu0
    %v1045 = vadd.f32 %v972, %v1044
    %v1046 = vpop.f32.mrb[0].mxu0
    %1047 = vdwg.mxu0
    %v1048 = vmax.f32 %v1045, 0.0
    %v1049 = vld [vmem:[%s5] sm:$0xf]
    %v1050 = vld [vmem:[%s6] sm:$0xf]
    %1052 = vset.pattern.permute.xlu0 0
    %1053 = vperm.xlu0 %1052, %v1050
    %v1054 = vpop.permute.xlu0 %1053
    %vm1056 = vcmask 39936
    %v1058 = vsel %vm1056, %v1049, 0
    %vm1060 = vcmask 1044480
    %v1062 = vsel %vm1060, %v1048, 0
    %1064 = vmatprep.subr.mxu0 0.0
    %v1065 = vand.u32 %v1062, 4294901760
    %1066 = vmatpush1.msra.mxu0 %v1065
    %1067 = vmatprep.subr.mxu0 0.0
    %1068 = vmatpush1.msra.mxu0 0.0
    %1069 = vmatprep.subr.mxu0 0.0
    %1070 = vmatpush1.msra.mxu0 0.0
    %1071 = vmatprep.subr.mxu0 0.0
    %1072 = vmatpush1.msra.mxu0 0.0
    %1073 = vmatprep.subr.mxu0 0.0
    %1074 = vmatpush1.msra.mxu0 0.0
    %1075 = vmatprep.subr.mxu0 0.0
    %1076 = vmatpush1.msra.mxu0 0.0
    %1077 = vmatprep.subr.mxu0 0.0
    %1078 = vmatpush1.msra.mxu0 0.0
    %1079 = vmatprep.subr.mxu0 0.0
    %1080 = vmatpush1.msra.mxu0 0.0
    %1081 = vmatprep.subr.mxu0 0.0
    %1082 = vmatpush1.msra.mxu0 0.0
    %1083 = vmatprep.subr.mxu0 0.0
    %1084 = vmatpush1.msra.mxu0 0.0
    %1085 = vmatprep.subr.mxu0 0.0
    %1086 = vmatpush1.msra.mxu0 0.0
    %1087 = vmatprep.subr.mxu0 0.0
    %1088 = vmatpush1.msra.mxu0 0.0
    %1089 = vmatprep.subr.mxu0 0.0
    %1090 = vmatpush1.msra.mxu0 0.0
    %1091 = vmatprep.subr.mxu0 0.0
    %1092 = vmatpush1.msra.mxu0 0.0
    %1093 = vmatprep.subr.mxu0 0.0
    %1094 = vmatpush1.msra.mxu0 0.0
    %1095 = vmatprep.subr.mxu0 0.0
    %1096 = vmatpush1.msra.mxu0 0.0
    %1097 = vmatprep.subr.mxu0 0.0
    %1098 = vmatpush1.msra.mxu0 0.0
    %1099 = vmatprep.subr.mxu0 0.0
    %1100 = vmatpush1.msra.mxu0 0.0
    %1101 = vmatprep.subr.mxu0 0.0
    %1102 = vmatpush1.msra.mxu0 0.0
    %1103 = vmatprep.subr.mxu0 0.0
    %1104 = vmatpush1.msra.mxu0 0.0
    %1105 = vmatprep.subr.mxu0 0.0
    %1106 = vmatpush1.msra.mxu0 0.0
    %1107 = vmatprep.subr.mxu0 0.0
    %1108 = vmatpush1.msra.mxu0 0.0
    %1109 = vmatprep.subr.mxu0 0.0
    %1110 = vmatpush1.msra.mxu0 0.0
    %1111 = vmatprep.subr.mxu0 0.0
    %1112 = vmatpush1.msra.mxu0 0.0
    %1113 = vmatprep.subr.mxu0 0.0
    %1114 = vmatpush1.msra.mxu0 0.0
    %1115 = vmatprep.subr.mxu0 0.0
    %1116 = vmatpush1.msra.mxu0 0.0
    %1117 = vmatprep.subr.mxu0 0.0
    %1118 = vmatpush1.msra.mxu0 0.0
    %1119 = vmatprep.subr.mxu0 0.0
    %1120 = vmatpush1.msra.mxu0 0.0
    %1121 = vmatprep.subr.mxu0 0.0
    %1122 = vmatpush1.msra.mxu0 0.0
    %1123 = vmatprep.subr.mxu0 0.0
    %1124 = vmatpush1.msra.mxu0 0.0
    %1125 = vmatprep.subr.mxu0 0.0
    %1126 = vmatpush1.msra.mxu0 0.0
    %1127 = vmatprep.subr.mxu0 0.0
    %1128 = vmatpush1.msra.mxu0 0.0
    %1129 = vmatprep.mubr.f32.mxu0 0.0
    %v1130 = vand.u32 %v1058, 4294901760
    %v1131 = vsub.f32 %v1058, %v1130
    %v1132 = vand.u32 %v1131, 4294901760
    %v1133 = vsub.f32 %v1131, %v1132
    %v1134 = vand.u32 %v1133, 4294901760
    %1135 = vmatmul.mubr.f32.gmra.mrb[0].mxu0 %v1134
    %v1136 = vpop.f32.mrb[0].mxu0
    %v1137 = vadd.f32 %v1054, %v1136
    %v1138 = vpop.f32.mrb[0].mxu0
    %1139 = vdwg.mxu0
    %1140 = vmatprep.subr.mxu0 0.0
    %v1141 = vand.u32 %v1062, 4294901760
    %v1142 = vsub.f32 %v1062, %v1141
    %v1143 = vand.u32 %v1142, 4294901760
    %v1144 = vsub.f32 %v1142, %v1143
    %v1145 = vand.u32 %v1144, 4294901760
    %1146 = vmatpush1.msra.mxu0 %v1145
    %1147 = vmatprep.subr.mxu0 0.0
    %1148 = vmatpush1.msra.mxu0 0.0
    %1149 = vmatprep.subr.mxu0 0.0
    %1150 = vmatpush1.msra.mxu0 0.0
    %1151 = vmatprep.subr.mxu0 0.0
    %1152 = vmatpush1.msra.mxu0 0.0
    %1153 = vmatprep.subr.mxu0 0.0
    %1154 = vmatpush1.msra.mxu0 0.0
    %1155 = vmatprep.subr.mxu0 0.0
    %1156 = vmatpush1.msra.mxu0 0.0
    %1157 = vmatprep.subr.mxu0 0.0
    %1158 = vmatpush1.msra.mxu0 0.0
    %1159 = vmatprep.subr.mxu0 0.0
    %1160 = vmatpush1.msra.mxu0 0.0
    %1161 = vmatprep.subr.mxu0 0.0
    %1162 = vmatpush1.msra.mxu0 0.0
    %1163 = vmatprep.subr.mxu0 0.0
    %1164 = vmatpush1.msra.mxu0 0.0
    %1165 = vmatprep.subr.mxu0 0.0
    %1166 = vmatpush1.msra.mxu0 0.0
    %1167 = vmatprep.subr.mxu0 0.0
    %1168 = vmatpush1.msra.mxu0 0.0
    %1169 = vmatprep.subr.mxu0 0.0
    %1170 = vmatpush1.msra.mxu0 0.0
    %1171 = vmatprep.subr.mxu0 0.0
    %1172 = vmatpush1.msra.mxu0 0.0
    %1173 = vmatprep.subr.mxu0 0.0
    %1174 = vmatpush1.msra.mxu0 0.0
    %1175 = vmatprep.subr.mxu0 0.0
    %1176 = vmatpush1.msra.mxu0 0.0
    %1177 = vmatprep.subr.mxu0 0.0
    %1178 = vmatpush1.msra.mxu0 0.0
    %1179 = vmatprep.subr.mxu0 0.0
    %1180 = vmatpush1.msra.mxu0 0.0
    %1181 = vmatprep.subr.mxu0 0.0
    %1182 = vmatpush1.msra.mxu0 0.0
    %1183 = vmatprep.subr.mxu0 0.0
    %1184 = vmatpush1.msra.mxu0 0.0
    %1185 = vmatprep.subr.mxu0 0.0
    %1186 = vmatpush1.msra.mxu0 0.0
    %1187 = vmatprep.subr.mxu0 0.0
    %1188 = vmatpush1.msra.mxu0 0.0
    %1189 = vmatprep.subr.mxu0 0.0
    %1190 = vmatpush1.msra.mxu0 0.0
    %1191 = vmatprep.subr.mxu0 0.0
    %1192 = vmatpush1.msra.mxu0 0.0
    %1193 = vmatprep.subr.mxu0 0.0
    %1194 = vmatpush1.msra.mxu0 0.0
    %1195 = vmatprep.subr.mxu0 0.0
    %1196 = vmatpush1.msra.mxu0 0.0
    %1197 = vmatprep.subr.mxu0 0.0
    %1198 = vmatpush1.msra.mxu0 0.0
    %1199 = vmatprep.subr.mxu0 0.0
    %1200 = vmatpush1.msra.mxu0 0.0
    %1201 = vmatprep.subr.mxu0 0.0
    %1202 = vmatpush1.msra.mxu0 0.0
    %1203 = vmatprep.subr.mxu0 0.0
    %1204 = vmatpush1.msra.mxu0 0.0
    %1205 = vmatprep.subr.mxu0 0.0
    %1206 = vmatpush1.msra.mxu0 0.0
    %1207 = vmatprep.subr.mxu0 0.0
    %1208 = vmatpush1.msra.mxu0 0.0
    %1209 = vmatprep.mubr.f32.mxu0 0.0
    %v1210 = vand.u32 %v1058, 4294901760
    %1211 = vmatmul.mubr.f32.gmra.mrb[0].mxu0 %v1210
    %v1212 = vpop.f32.mrb[0].mxu0
    %v1213 = vadd.f32 %v1137, %v1212
    %v1214 = vpop.f32.mrb[0].mxu0
    %1215 = vdwg.mxu0
    %1216 = vmatprep.subr.mxu0 0.0
    %v1217 = vand.u32 %v1062, 4294901760
    %v1218 = vsub.f32 %v1062, %v1217
    %1219 = vmatpush1.msra.mxu0 %v1218
    %1220 = vmatprep.subr.mxu0 0.0
    %1221 = vmatpush1.msra.mxu0 0.0
    %1222 = vmatprep.subr.mxu0 0.0
    %1223 = vmatpush1.msra.mxu0 0.0
    %1224 = vmatprep.subr.mxu0 0.0
    %1225 = vmatpush1.msra.mxu0 0.0
    %1226 = vmatprep.subr.mxu0 0.0
    %1227 = vmatpush1.msra.mxu0 0.0
    %1228 = vmatprep.subr.mxu0 0.0
    %1229 = vmatpush1.msra.mxu0 0.0
    %1230 = vmatprep.subr.mxu0 0.0
    %1231 = vmatpush1.msra.mxu0 0.0
    %1232 = vmatprep.subr.mxu0 0.0
    %1233 = vmatpush1.msra.mxu0 0.0
    %1234 = vmatprep.subr.mxu0 0.0
    %1235 = vmatpush1.msra.mxu0 0.0
    %1236 = vmatprep.subr.mxu0 0.0
    %1237 = vmatpush1.msra.mxu0 0.0
    %1238 = vmatprep.subr.mxu0 0.0
    %1239 = vmatpush1.msra.mxu0 0.0
    %1240 = vmatprep.subr.mxu0 0.0
    %1241 = vmatpush1.msra.mxu0 0.0
    %1242 = vmatprep.subr.mxu0 0.0
    %1243 = vmatpush1.msra.mxu0 0.0
    %1244 = vmatprep.subr.mxu0 0.0
    %1245 = vmatpush1.msra.mxu0 0.0
    %1246 = vmatprep.subr.mxu0 0.0
    %1247 = vmatpush1.msra.mxu0 0.0
    %1248 = vmatprep.subr.mxu0 0.0
    %1249 = vmatpush1.msra.mxu0 0.0
    %1250 = vmatprep.subr.mxu0 0.0
    %1251 = vmatpush1.msra.mxu0 0.0
    %1252 = vmatprep.subr.mxu0 0.0
    %1253 = vmatpush1.msra.mxu0 0.0
    %1254 = vmatprep.subr.mxu0 0.0
    %1255 = vmatpush1.msra.mxu0 0.0
    %1256 = vmatprep.subr.mxu0 0.0
    %1257 = vmatpush1.msra.mxu0 0.0
    %1258 = vmatprep.subr.mxu0 0.0
    %1259 = vmatpush1.msra.mxu0 0.0
    %1260 = vmatprep.subr.mxu0 0.0
    %1261 = vmatpush1.msra.mxu0 0.0
    %1262 = vmatprep.subr.mxu0 0.0
    %1263 = vmatpush1.msra.mxu0 0.0
    %1264 = vmatprep.subr.mxu0 0.0
    %1265 = vmatpush1.msra.mxu0 0.0
    %1266 = vmatprep.subr.mxu0 0.0
    %1267 = vmatpush1.msra.mxu0 0.0
    %1268 = vmatprep.subr.mxu0 0.0
    %1269 = vmatpush1.msra.mxu0 0.0
    %1270 = vmatprep.subr.mxu0 0.0
    %1271 = vmatpush1.msra.mxu0 0.0
    %1272 = vmatprep.subr.mxu0 0.0
    %1273 = vmatpush1.msra.mxu0 0.0
    %1274 = vmatprep.subr.mxu0 0.0
    %1275 = vmatpush1.msra.mxu0 0.0
    %1276 = vmatprep.subr.mxu0 0.0
    %1277 = vmatpush1.msra.mxu0 0.0
    %1278 = vmatprep.subr.mxu0 0.0
    %1279 = vmatpush1.msra.mxu0 0.0
    %1280 = vmatprep.subr.mxu0 0.0
    %1281 = vmatpush1.msra.mxu0 0.0
    %1282 = vmatprep.mubr.f32.mxu0 0.0
    %v1283 = vand.u32 %v1058, 4294901760
    %v1284 = vsub.f32 %v1058, %v1283
    %1285 = vmatmul.mubr.f32.gmra.mrb[0].mxu0 %v1284
    %v1286 = vpop.f32.mrb[0].mxu0
    %v1287 = vadd.f32 %v1213, %v1286
    %v1288 = vpop.f32.mrb[0].mxu0
    %1289 = vdwg.mxu0
    %1290 = vmatprep.subr.mxu0 0.0
    %v1291 = vand.u32 %v1062, 4294901760
    %1292 = vmatpush1.msra.mxu0 %v1291
    %1293 = vmatprep.subr.mxu0 0.0
    %1294 = vmatpush1.msra.mxu0 0.0
    %1295 = vmatprep.subr.mxu0 0.0
    %1296 = vmatpush1.msra.mxu0 0.0
    %1297 = vmatprep.subr.mxu0 0.0
    %1298 = vmatpush1.msra.mxu0 0.0
    %1299 = vmatprep.subr.mxu0 0.0
    %1300 = vmatpush1.msra.mxu0 0.0
    %1301 = vmatprep.subr.mxu0 0.0
    %1302 = vmatpush1.msra.mxu0 0.0
    %1303 = vmatprep.subr.mxu0 0.0
    %1304 = vmatpush1.msra.mxu0 0.0
    %1305 = vmatprep.subr.mxu0 0.0
    %1306 = vmatpush1.msra.mxu0 0.0
    %1307 = vmatprep.subr.mxu0 0.0
    %1308 = vmatpush1.msra.mxu0 0.0
    %1309 = vmatprep.subr.mxu0 0.0
    %1310 = vmatpush1.msra.mxu0 0.0
    %1311 = vmatprep.subr.mxu0 0.0
    %1312 = vmatpush1.msra.mxu0 0.0
    %1313 = vmatprep.subr.mxu0 0.0
    %1314 = vmatpush1.msra.mxu0 0.0
    %1315 = vmatprep.subr.mxu0 0.0
    %1316 = vmatpush1.msra.mxu0 0.0
    %1317 = vmatprep.subr.mxu0 0.0
    %1318 = vmatpush1.msra.mxu0 0.0
    %1319 = vmatprep.subr.mxu0 0.0
    %1320 = vmatpush1.msra.mxu0 0.0
    %1321 = vmatprep.subr.mxu0 0.0
    %1322 = vmatpush1.msra.mxu0 0.0
    %1323 = vmatprep.subr.mxu0 0.0
    %1324 = vmatpush1.msra.mxu0 0.0
    %1325 = vmatprep.subr.mxu0 0.0
    %1326 = vmatpush1.msra.mxu0 0.0
    %1327 = vmatprep.subr.mxu0 0.0
    %1328 = vmatpush1.msra.mxu0 0.0
    %1329 = vmatprep.subr.mxu0 0.0
    %1330 = vmatpush1.msra.mxu0 0.0
    %1331 = vmatprep.subr.mxu0 0.0
    %1332 = vmatpush1.msra.mxu0 0.0
    %1333 = vmatprep.subr.mxu0 0.0
    %1334 = vmatpush1.msra.mxu0 0.0
    %1335 = vmatprep.subr.mxu0 0.0
    %1336 = vmatpush1.msra.mxu0 0.0
    %1337 = vmatprep.subr.mxu0 0.0
    %1338 = vmatpush1.msra.mxu0 0.0
    %1339 = vmatprep.subr.mxu0 0.0
    %1340 = vmatpush1.msra.mxu0 0.0
    %1341 = vmatprep.subr.mxu0 0.0
    %1342 = vmatpush1.msra.mxu0 0.0
    %1343 = vmatprep.subr.mxu0 0.0
    %1344 = vmatpush1.msra.mxu0 0.0
    %1345 = vmatprep.subr.mxu0 0.0
    %1346 = vmatpush1.msra.mxu0 0.0
    %1347 = vmatprep.subr.mxu0 0.0
    %1348 = vmatpush1.msra.mxu0 0.0
    %1349 = vmatprep.subr.mxu0 0.0
    %1350 = vmatpush1.msra.mxu0 0.0
    %1351 = vmatprep.subr.mxu0 0.0
    %1352 = vmatpush1.msra.mxu0 0.0
    %1353 = vmatprep.subr.mxu0 0.0
    %1354 = vmatpush1.msra.mxu0 0.0
    %1355 = vmatprep.mubr.f32.mxu0 0.0
    %v1356 = vand.u32 %v1058, 4294901760
    %v1357 = vsub.f32 %v1058, %v1356
    %v1358 = vand.u32 %v1357, 4294901760
    %1359 = vmatmul.mubr.f32.gmra.mrb[0].mxu0 %v1358
    %v1360 = vpop.f32.mrb[0].mxu0
    %v1361 = vadd.f32 %v1287, %v1360
    %v1362 = vpop.f32.mrb[0].mxu0
    %1363 = vdwg.mxu0
    %1364 = vmatprep.subr.mxu0 0.0
    %v1365 = vand.u32 %v1062, 4294901760
    %v1366 = vsub.f32 %v1062, %v1365
    %v1367 = vand.u32 %v1366, 4294901760
    %1368 = vmatpush1.msra.mxu0 %v1367
    %1369 = vmatprep.subr.mxu0 0.0
    %1370 = vmatpush1.msra.mxu0 0.0
    %1371 = vmatprep.subr.mxu0 0.0
    %1372 = vmatpush1.msra.mxu0 0.0
    %1373 = vmatprep.subr.mxu0 0.0
    %1374 = vmatpush1.msra.mxu0 0.0
    %1375 = vmatprep.subr.mxu0 0.0
    %1376 = vmatpush1.msra.mxu0 0.0
    %1377 = vmatprep.subr.mxu0 0.0
    %1378 = vmatpush1.msra.mxu0 0.0
    %1379 = vmatprep.subr.mxu0 0.0
    %1380 = vmatpush1.msra.mxu0 0.0
    %1381 = vmatprep.subr.mxu0 0.0
    %1382 = vmatpush1.msra.mxu0 0.0
    %1383 = vmatprep.subr.mxu0 0.0
    %1384 = vmatpush1.msra.mxu0 0.0
    %1385 = vmatprep.subr.mxu0 0.0
    %1386 = vmatpush1.msra.mxu0 0.0
    %1387 = vmatprep.subr.mxu0 0.0
    %1388 = vmatpush1.msra.mxu0 0.0
    %1389 = vmatprep.subr.mxu0 0.0
    %1390 = vmatpush1.msra.mxu0 0.0
    %1391 = vmatprep.subr.mxu0 0.0
    %1392 = vmatpush1.msra.mxu0 0.0
    %1393 = vmatprep.subr.mxu0 0.0
    %1394 = vmatpush1.msra.mxu0 0.0
    %1395 = vmatprep.subr.mxu0 0.0
    %1396 = vmatpush1.msra.mxu0 0.0
    %1397 = vmatprep.subr.mxu0 0.0
    %1398 = vmatpush1.msra.mxu0 0.0
    %1399 = vmatprep.subr.mxu0 0.0
    %1400 = vmatpush1.msra.mxu0 0.0
    %1401 = vmatprep.subr.mxu0 0.0
    %1402 = vmatpush1.msra.mxu0 0.0
    %1403 = vmatprep.subr.mxu0 0.0
    %1404 = vmatpush1.msra.mxu0 0.0
    %1405 = vmatprep.subr.mxu0 0.0
    %1406 = vmatpush1.msra.mxu0 0.0
    %1407 = vmatprep.subr.mxu0 0.0
    %1408 = vmatpush1.msra.mxu0 0.0
    %1409 = vmatprep.subr.mxu0 0.0
    %1410 = vmatpush1.msra.mxu0 0.0
    %1411 = vmatprep.subr.mxu0 0.0
    %1412 = vmatpush1.msra.mxu0 0.0
    %1413 = vmatprep.subr.mxu0 0.0
    %1414 = vmatpush1.msra.mxu0 0.0
    %1415 = vmatprep.subr.mxu0 0.0
    %1416 = vmatpush1.msra.mxu0 0.0
    %1417 = vmatprep.subr.mxu0 0.0
    %1418 = vmatpush1.msra.mxu0 0.0
    %1419 = vmatprep.subr.mxu0 0.0
    %1420 = vmatpush1.msra.mxu0 0.0
    %1421 = vmatprep.subr.mxu0 0.0
    %1422 = vmatpush1.msra.mxu0 0.0
    %1423 = vmatprep.subr.mxu0 0.0
    %1424 = vmatpush1.msra.mxu0 0.0
    %1425 = vmatprep.subr.mxu0 0.0
    %1426 = vmatpush1.msra.mxu0 0.0
    %1427 = vmatprep.subr.mxu0 0.0
    %1428 = vmatpush1.msra.mxu0 0.0
    %1429 = vmatprep.subr.mxu0 0.0
    %1430 = vmatpush1.msra.mxu0 0.0
    %1431 = vmatprep.mubr.f32.mxu0 0.0
    %v1432 = vand.u32 %v1058, 4294901760
    %1433 = vmatmul.mubr.f32.gmra.mrb[0].mxu0 %v1432
    %v1434 = vpop.f32.mrb[0].mxu0
    %v1435 = vadd.f32 %v1361, %v1434
    %v1436 = vpop.f32.mrb[0].mxu0
    %1437 = vdwg.mxu0
    %1438 = vmatprep.subr.mxu0 0.0
    %v1439 = vand.u32 %v1062, 4294901760
    %1440 = vmatpush1.msra.mxu0 %v1439
    %1441 = vmatprep.subr.mxu0 0.0
    %1442 = vmatpush1.msra.mxu0 0.0
    %1443 = vmatprep.subr.mxu0 0.0
    %1444 = vmatpush1.msra.mxu0 0.0
    %1445 = vmatprep.subr.mxu0 0.0
    %1446 = vmatpush1.msra.mxu0 0.0
    %1447 = vmatprep.subr.mxu0 0.0
    %1448 = vmatpush1.msra.mxu0 0.0
    %1449 = vmatprep.subr.mxu0 0.0
    %1450 = vmatpush1.msra.mxu0 0.0
    %1451 = vmatprep.subr.mxu0 0.0
    %1452 = vmatpush1.msra.mxu0 0.0
    %1453 = vmatprep.subr.mxu0 0.0
    %1454 = vmatpush1.msra.mxu0 0.0
    %1455 = vmatprep.subr.mxu0 0.0
    %1456 = vmatpush1.msra.mxu0 0.0
    %1457 = vmatprep.subr.mxu0 0.0
    %1458 = vmatpush1.msra.mxu0 0.0
    %1459 = vmatprep.subr.mxu0 0.0
    %1460 = vmatpush1.msra.mxu0 0.0
    %1461 = vmatprep.subr.mxu0 0.0
    %1462 = vmatpush1.msra.mxu0 0.0
    %1463 = vmatprep.subr.mxu0 0.0
    %1464 = vmatpush1.msra.mxu0 0.0
    %1465 = vmatprep.subr.mxu0 0.0
    %1466 = vmatpush1.msra.mxu0 0.0
    %1467 = vmatprep.subr.mxu0 0.0
    %1468 = vmatpush1.msra.mxu0 0.0
    %1469 = vmatprep.subr.mxu0 0.0
    %1470 = vmatpush1.msra.mxu0 0.0
    %1471 = vmatprep.subr.mxu0 0.0
    %1472 = vmatpush1.msra.mxu0 0.0
    %1473 = vmatprep.subr.mxu0 0.0
    %1474 = vmatpush1.msra.mxu0 0.0
    %1475 = vmatprep.subr.mxu0 0.0
    %1476 = vmatpush1.msra.mxu0 0.0
    %1477 = vmatprep.subr.mxu0 0.0
    %1478 = vmatpush1.msra.mxu0 0.0
    %1479 = vmatprep.subr.mxu0 0.0
    %1480 = vmatpush1.msra.mxu0 0.0
    %1481 = vmatprep.subr.mxu0 0.0
    %1482 = vmatpush1.msra.mxu0 0.0
    %1483 = vmatprep.subr.mxu0 0.0
    %1484 = vmatpush1.msra.mxu0 0.0
    %1485 = vmatprep.subr.mxu0 0.0
    %1486 = vmatpush1.msra.mxu0 0.0
    %1487 = vmatprep.subr.mxu0 0.0
    %1488 = vmatpush1.msra.mxu0 0.0
    %1489 = vmatprep.subr.mxu0 0.0
    %1490 = vmatpush1.msra.mxu0 0.0
    %1491 = vmatprep.subr.mxu0 0.0
    %1492 = vmatpush1.msra.mxu0 0.0
    %1493 = vmatprep.subr.mxu0 0.0
    %1494 = vmatpush1.msra.mxu0 0.0
    %1495 = vmatprep.subr.mxu0 0.0
    %1496 = vmatpush1.msra.mxu0 0.0
    %1497 = vmatprep.subr.mxu0 0.0
    %1498 = vmatpush1.msra.mxu0 0.0
    %1499 = vmatprep.subr.mxu0 0.0
    %1500 = vmatpush1.msra.mxu0 0.0
    %1501 = vmatprep.subr.mxu0 0.0
    %1502 = vmatpush1.msra.mxu0 0.0
    %1503 = vmatprep.mubr.f32.mxu0 0.0
    %v1504 = vand.u32 %v1058, 4294901760
    %1505 = vmatmul.mubr.f32.gmra.mrb[0].mxu0 %v1504
    %v1506 = vpop.f32.mrb[0].mxu0
    %v1507 = vadd.f32 %v1435, %v1506
    %v1508 = vpop.f32.mrb[0].mxu0
    %1509 = vdwg.mxu0
    %v1510 = vmax.f32 %v1507, 0.0
    %v1511 = vld [vmem:[%s7] sm:$0x7]
    %v1512 = vld [vmem:[%s8] sm:$0x7]
    %1514 = vset.pattern.permute.xlu0 0
    %1515 = vperm.xlu0 %1514, %v1512
    %v1516 = vpop.permute.xlu0 %1515
    %vm1518 = vcmask 31744
    %v1520 = vsel %vm1518, %v1511, 0
    %vm1522 = vcmask 1043456
    %v1524 = vsel %vm1522, %v1510, 0
    %1526 = vmatprep.subr.mxu0 0.0
    %v1527 = vand.u32 %v1524, 4294901760
    %1528 = vmatpush1.msra.mxu0 %v1527
    %1529 = vmatprep.subr.mxu0 0.0
    %1530 = vmatpush1.msra.mxu0 0.0
    %1531 = vmatprep.subr.mxu0 0.0
    %1532 = vmatpush1.msra.mxu0 0.0
    %1533 = vmatprep.subr.mxu0 0.0
    %1534 = vmatpush1.msra.mxu0 0.0
    %1535 = vmatprep.subr.mxu0 0.0
    %1536 = vmatpush1.msra.mxu0 0.0
    %1537 = vmatprep.subr.mxu0 0.0
    %1538 = vmatpush1.msra.mxu0 0.0
    %1539 = vmatprep.subr.mxu0 0.0
    %1540 = vmatpush1.msra.mxu0 0.0
    %1541 = vmatprep.subr.mxu0 0.0
    %1542 = vmatpush1.msra.mxu0 0.0
    %1543 = vmatprep.subr.mxu0 0.0
    %1544 = vmatpush1.msra.mxu0 0.0
    %1545 = vmatprep.subr.mxu0 0.0
    %1546 = vmatpush1.msra.mxu0 0.0
    %1547 = vmatprep.subr.mxu0 0.0
    %1548 = vmatpush1.msra.mxu0 0.0
    %1549 = vmatprep.subr.mxu0 0.0
    %1550 = vmatpush1.msra.mxu0 0.0
    %1551 = vmatprep.subr.mxu0 0.0
    %1552 = vmatpush1.msra.mxu0 0.0
    %1553 = vmatprep.subr.mxu0 0.0
    %1554 = vmatpush1.msra.mxu0 0.0
    %1555 = vmatprep.subr.mxu0 0.0
    %1556 = vmatpush1.msra.mxu0 0.0
    %1557 = vmatprep.subr.mxu0 0.0
    %1558 = vmatpush1.msra.mxu0 0.0
    %1559 = vmatprep.subr.mxu0 0.0
    %1560 = vmatpush1.msra.mxu0 0.0
    %1561 = vmatprep.subr.mxu0 0.0
    %1562 = vmatpush1.msra.mxu0 0.0
    %1563 = vmatprep.subr.mxu0 0.0
    %1564 = vmatpush1.msra.mxu0 0.0
    %1565 = vmatprep.subr.mxu0 0.0
    %1566 = vmatpush1.msra.mxu0 0.0
    %1567 = vmatprep.subr.mxu0 0.0
    %1568 = vmatpush1.msra.mxu0 0.0
    %1569 = vmatprep.subr.mxu0 0.0
    %1570 = vmatpush1.msra.mxu0 0.0
    %1571 = vmatprep.subr.mxu0 0.0
    %1572 = vmatpush1.msra.mxu0 0.0
    %1573 = vmatprep.subr.mxu0 0.0
    %1574 = vmatpush1.msra.mxu0 0.0
    %1575 = vmatprep.subr.mxu0 0.0
    %1576 = vmatpush1.msra.mxu0 0.0
    %1577 = vmatprep.subr.mxu0 0.0
    %1578 = vmatpush1.msra.mxu0 0.0
    %1579 = vmatprep.subr.mxu0 0.0
    %1580 = vmatpush1.msra.mxu0 0.0
    %1581 = vmatprep.subr.mxu0 0.0
    %1582 = vmatpush1.msra.mxu0 0.0
    %1583 = vmatprep.subr.mxu0 0.0
    %1584 = vmatpush1.msra.mxu0 0.0
    %1585 = vmatprep.subr.mxu0 0.0
    %1586 = vmatpush1.msra.mxu0 0.0
    %1587 = vmatprep.subr.mxu0 0.0
    %1588 = vmatpush1.msra.mxu0 0.0
    %1589 = vmatprep.subr.mxu0 0.0
    %1590 = vmatpush1.msra.mxu0 0.0
    %1591 = vmatprep.mubr.f32.mxu0 0.0
    %v1592 = vand.u32 %v1520, 4294901760
    %v1593 = vsub.f32 %v1520, %v1592
    %v1594 = vand.u32 %v1593, 4294901760
    %v1595 = vsub.f32 %v1593, %v1594
    %v1596 = vand.u32 %v1595, 4294901760
    %1597 = vmatmul.mubr.f32.gmra.mrb[0].mxu0 %v1596
    %v1598 = vpop.f32.mrb[0].mxu0
    %v1599 = vadd.f32 %v1516, %v1598
    %v1600 = vpop.f32.mrb[0].mxu0
    %1601 = vdwg.mxu0
    %1602 = vmatprep.subr.mxu0 0.0
    %v1603 = vand.u32 %v1524, 4294901760
    %v1604 = vsub.f32 %v1524, %v1603
    %v1605 = vand.u32 %v1604, 4294901760
    %v1606 = vsub.f32 %v1604, %v1605
    %v1607 = vand.u32 %v1606, 4294901760
    %1608 = vmatpush1.msra.mxu0 %v1607
    %1609 = vmatprep.subr.mxu0 0.0
    %1610 = vmatpush1.msra.mxu0 0.0
    %1611 = vmatprep.subr.mxu0 0.0
    %1612 = vmatpush1.msra.mxu0 0.0
    %1613 = vmatprep.subr.mxu0 0.0
    %1614 = vmatpush1.msra.mxu0 0.0
    %1615 = vmatprep.subr.mxu0 0.0
    %1616 = vmatpush1.msra.mxu0 0.0
    %1617 = vmatprep.subr.mxu0 0.0
    %1618 = vmatpush1.msra.mxu0 0.0
    %1619 = vmatprep.subr.mxu0 0.0
    %1620 = vmatpush1.msra.mxu0 0.0
    %1621 = vmatprep.subr.mxu0 0.0
    %1622 = vmatpush1.msra.mxu0 0.0
    %1623 = vmatprep.subr.mxu0 0.0
    %1624 = vmatpush1.msra.mxu0 0.0
    %1625 = vmatprep.subr.mxu0 0.0
    %1626 = vmatpush1.msra.mxu0 0.0
    %1627 = vmatprep.subr.mxu0 0.0
    %1628 = vmatpush1.msra.mxu0 0.0
    %1629 = vmatprep.subr.mxu0 0.0
    %1630 = vmatpush1.msra.mxu0 0.0
    %1631 = vmatprep.subr.mxu0 0.0
    %1632 = vmatpush1.msra.mxu0 0.0
    %1633 = vmatprep.subr.mxu0 0.0
    %1634 = vmatpush1.msra.mxu0 0.0
    %1635 = vmatprep.subr.mxu0 0.0
    %1636 = vmatpush1.msra.mxu0 0.0
    %1637 = vmatprep.subr.mxu0 0.0
    %1638 = vmatpush1.msra.mxu0 0.0
    %1639 = vmatprep.subr.mxu0 0.0
    %1640 = vmatpush1.msra.mxu0 0.0
    %1641 = vmatprep.subr.mxu0 0.0
    %1642 = vmatpush1.msra.mxu0 0.0
    %1643 = vmatprep.subr.mxu0 0.0
    %1644 = vmatpush1.msra.mxu0 0.0
    %1645 = vmatprep.subr.mxu0 0.0
    %1646 = vmatpush1.msra.mxu0 0.0
    %1647 = vmatprep.subr.mxu0 0.0
    %1648 = vmatpush1.msra.mxu0 0.0
    %1649 = vmatprep.subr.mxu0 0.0
    %1650 = vmatpush1.msra.mxu0 0.0
    %1651 = vmatprep.subr.mxu0 0.0
    %1652 = vmatpush1.msra.mxu0 0.0
    %1653 = vmatprep.subr.mxu0 0.0
    %1654 = vmatpush1.msra.mxu0 0.0
    %1655 = vmatprep.subr.mxu0 0.0
    %1656 = vmatpush1.msra.mxu0 0.0
    %1657 = vmatprep.subr.mxu0 0.0
    %1658 = vmatpush1.msra.mxu0 0.0
    %1659 = vmatprep.subr.mxu0 0.0
    %1660 = vmatpush1.msra.mxu0 0.0
    %1661 = vmatprep.subr.mxu0 0.0
    %1662 = vmatpush1.msra.mxu0 0.0
    %1663 = vmatprep.subr.mxu0 0.0
    %1664 = vmatpush1.msra.mxu0 0.0
    %1665 = vmatprep.subr.mxu0 0.0
    %1666 = vmatpush1.msra.mxu0 0.0
    %1667 = vmatprep.subr.mxu0 0.0
    %1668 = vmatpush1.msra.mxu0 0.0
    %1669 = vmatprep.subr.mxu0 0.0
    %1670 = vmatpush1.msra.mxu0 0.0
    %1671 = vmatprep.mubr.f32.mxu0 0.0
    %v1672 = vand.u32 %v1520, 4294901760
    %1673 = vmatmul.mubr.f32.gmra.mrb[0].mxu0 %v1672
    %v1674 = vpop.f32.mrb[0].mxu0
    %v1675 = vadd.f32 %v1599, %v1674
    %v1676 = vpop.f32.mrb[0].mxu0
    %1677 = vdwg.mxu0
    %1678 = vmatprep.subr.mxu0 0.0
    %v1679 = vand.u32 %v1524, 4294901760
    %v1680 = vsub.f32 %v1524, %v1679
    %1681 = vmatpush1.msra.mxu0 %v1680
    %1682 = vmatprep.subr.mxu0 0.0
    %1683 = vmatpush1.msra.mxu0 0.0
    %1684 = vmatprep.subr.mxu0 0.0
    %1685 = vmatpush1.msra.mxu0 0.0
    %1686 = vmatprep.subr.mxu0 0.0
    %1687 = vmatpush1.msra.mxu0 0.0
    %1688 = vmatprep.subr.mxu0 0.0
    %1689 = vmatpush1.msra.mxu0 0.0
    %1690 = vmatprep.subr.mxu0 0.0
    %1691 = vmatpush1.msra.mxu0 0.0
    %1692 = vmatprep.subr.mxu0 0.0
    %1693 = vmatpush1.msra.mxu0 0.0
    %1694 = vmatprep.subr.mxu0 0.0
    %1695 = vmatpush1.msra.mxu0 0.0
    %1696 = vmatprep.subr.mxu0 0.0
    %1697 = vmatpush1.msra.mxu0 0.0
    %1698 = vmatprep.subr.mxu0 0.0
    %1699 = vmatpush1.msra.mxu0 0.0
    %1700 = vmatprep.subr.mxu0 0.0
    %1701 = vmatpush1.msra.mxu0 0.0
    %1702 = vmatprep.subr.mxu0 0.0
    %1703 = vmatpush1.msra.mxu0 0.0
    %1704 = vmatprep.subr.mxu0 0.0
    %1705 = vmatpush1.msra.mxu0 0.0
    %1706 = vmatprep.subr.mxu0 0.0
    %1707 = vmatpush1.msra.mxu0 0.0
    %1708 = vmatprep.subr.mxu0 0.0
    %1709 = vmatpush1.msra.mxu0 0.0
    %1710 = vmatprep.subr.mxu0 0.0
    %1711 = vmatpush1.msra.mxu0 0.0
    %1712 = vmatprep.subr.mxu0 0.0
    %1713 = vmatpush1.msra.mxu0 0.0
    %1714 = vmatprep.subr.mxu0 0.0
    %1715 = vmatpush1.msra.mxu0 0.0
    %1716 = vmatprep.subr.mxu0 0.0
    %1717 = vmatpush1.msra.mxu0 0.0
    %1718 = vmatprep.subr.mxu0 0.0
    %1719 = vmatpush1.msra.mxu0 0.0
    %1720 = vmatprep.subr.mxu0 0.0
    %1721 = vmatpush1.msra.mxu0 0.0
    %1722 = vmatprep.subr.mxu0 0.0
    %1723 = vmatpush1.msra.mxu0 0.0
    %1724 = vmatprep.subr.mxu0 0.0
    %1725 = vmatpush1.msra.mxu0 0.0
    %1726 = vmatprep.subr.mxu0 0.0
    %1727 = vmatpush1.msra.mxu0 0.0
    %1728 = vmatprep.subr.mxu0 0.0
    %1729 = vmatpush1.msra.mxu0 0.0
    %1730 = vmatprep.subr.mxu0 0.0
    %1731 = vmatpush1.msra.mxu0 0.0
    %1732 = vmatprep.subr.mxu0 0.0
    %1733 = vmatpush1.msra.mxu0 0.0
    %1734 = vmatprep.subr.mxu0 0.0
    %1735 = vmatpush1.msra.mxu0 0.0
    %1736 = vmatprep.subr.mxu0 0.0
    %1737 = vmatpush1.msra.mxu0 0.0
    %1738 = vmatprep.subr.mxu0 0.0
    %1739 = vmatpush1.msra.mxu0 0.0
    %1740 = vmatprep.subr.mxu0 0.0
    %1741 = vmatpush1.msra.mxu0 0.0
    %1742 = vmatprep.subr.mxu0 0.0
    %1743 = vmatpush1.msra.mxu0 0.0
    %1744 = vmatprep.mubr.f32.mxu0 0.0
    %v1745 = vand.u32 %v1520, 4294901760
    %v1746 = vsub.f32 %v1520, %v1745
    %1747 = vmatmul.mubr.f32.gmra.mrb[0].mxu0 %v1746
    %v1748 = vpop.f32.mrb[0].mxu0
    %v1749 = vadd.f32 %v1675, %v1748
    %v1750 = vpop.f32.mrb[0].mxu0
    %1751 = vdwg.mxu0
    %1752 = vmatprep.subr.mxu0 0.0
    %v1753 = vand.u32 %v1524, 4294901760
    %1754 = vmatpush1.msra.mxu0 %v1753
    %1755 = vmatprep.subr.mxu0 0.0
    %1756 = vmatpush1.msra.mxu0 0.0
    %1757 = vmatprep.subr.mxu0 0.0
    %1758 = vmatpush1.msra.mxu0 0.0
    %1759 = vmatprep.subr.mxu0 0.0
    %1760 = vmatpush1.msra.mxu0 0.0
    %1761 = vmatprep.subr.mxu0 0.0
    %1762 = vmatpush1.msra.mxu0 0.0
    %1763 = vmatprep.subr.mxu0 0.0
    %1764 = vmatpush1.msra.mxu0 0.0
    %1765 = vmatprep.subr.mxu0 0.0
    %1766 = vmatpush1.msra.mxu0 0.0
    %1767 = vmatprep.subr.mxu0 0.0
    %1768 = vmatpush1.msra.mxu0 0.0
    %1769 = vmatprep.subr.mxu0 0.0
    %1770 = vmatpush1.msra.mxu0 0.0
    %1771 = vmatprep.subr.mxu0 0.0
    %1772 = vmatpush1.msra.mxu0 0.0
    %1773 = vmatprep.subr.mxu0 0.0
    %1774 = vmatpush1.msra.mxu0 0.0
    %1775 = vmatprep.subr.mxu0 0.0
    %1776 = vmatpush1.msra.mxu0 0.0
    %1777 = vmatprep.subr.mxu0 0.0
    %1778 = vmatpush1.msra.mxu0 0.0
    %1779 = vmatprep.subr.mxu0 0.0
    %1780 = vmatpush1.msra.mxu0 0.0
    %1781 = vmatprep.subr.mxu0 0.0
    %1782 = vmatpush1.msra.mxu0 0.0
    %1783 = vmatprep.subr.mxu0 0.0
    %1784 = vmatpush1.msra.mxu0 0.0
    %1785 = vmatprep.subr.mxu0 0.0
    %1786 = vmatpush1.msra.mxu0 0.0
    %1787 = vmatprep.subr.mxu0 0.0
    %1788 = vmatpush1.msra.mxu0 0.0
    %1789 = vmatprep.subr.mxu0 0.0
    %1790 = vmatpush1.msra.mxu0 0.0
    %1791 = vmatprep.subr.mxu0 0.0
    %1792 = vmatpush1.msra.mxu0 0.0
    %1793 = vmatprep.subr.mxu0 0.0
    %1794 = vmatpush1.msra.mxu0 0.0
    %1795 = vmatprep.subr.mxu0 0.0
    %1796 = vmatpush1.msra.mxu0 0.0
    %1797 = vmatprep.subr.mxu0 0.0
    %1798 = vmatpush1.msra.mxu0 0.0
    %1799 = vmatprep.subr.mxu0 0.0
    %1800 = vmatpush1.msra.mxu0 0.0
    %1801 = vmatprep.subr.mxu0 0.0
    %1802 = vmatpush1.msra.mxu0 0.0
    %1803 = vmatprep.subr.mxu0 0.0
    %1804 = vmatpush1.msra.mxu0 0.0
    %1805 = vmatprep.subr.mxu0 0.0
    %1806 = vmatpush1.msra.mxu0 0.0
    %1807 = vmatprep.subr.mxu0 0.0
    %1808 = vmatpush1.msra.mxu0 0.0
    %1809 = vmatprep.subr.mxu0 0.0
    %1810 = vmatpush1.msra.mxu0 0.0
    %1811 = vmatprep.subr.mxu0 0.0
    %1812 = vmatpush1.msra.mxu0 0.0
    %1813 = vmatprep.subr.mxu0 0.0
    %1814 = vmatpush1.msra.mxu0 0.0
    %1815 = vmatprep.subr.mxu0 0.0
    %1816 = vmatpush1.msra.mxu0 0.0
    %1817 = vmatprep.mubr.f32.mxu0 0.0
    %v1818 = vand.u32 %v1520, 4294901760
    %v1819 = vsub.f32 %v1520, %v1818
    %v1820 = vand.u32 %v1819, 4294901760
    %1821 = vmatmul.mubr.f32.gmra.mrb[0].mxu0 %v1820
    %v1822 = vpop.f32.mrb[0].mxu0
    %v1823 = vadd.f32 %v1749, %v1822
    %v1824 = vpop.f32.mrb[0].mxu0
    %1825 = vdwg.mxu0
    %1826 = vmatprep.subr.mxu0 0.0
    %v1827 = vand.u32 %v1524, 4294901760
    %v1828 = vsub.f32 %v1524, %v1827
    %v1829 = vand.u32 %v1828, 4294901760
    %1830 = vmatpush1.msra.mxu0 %v1829
    %1831 = vmatprep.subr.mxu0 0.0
    %1832 = vmatpush1.msra.mxu0 0.0
    %1833 = vmatprep.subr.mxu0 0.0
    %1834 = vmatpush1.msra.mxu0 0.0
    %1835 = vmatprep.subr.mxu0 0.0
    %1836 = vmatpush1.msra.mxu0 0.0
    %1837 = vmatprep.subr.mxu0 0.0
    %1838 = vmatpush1.msra.mxu0 0.0
    %1839 = vmatprep.subr.mxu0 0.0
    %1840 = vmatpush1.msra.mxu0 0.0
    %1841 = vmatprep.subr.mxu0 0.0
    %1842 = vmatpush1.msra.mxu0 0.0
    %1843 = vmatprep.subr.mxu0 0.0
    %1844 = vmatpush1.msra.mxu0 0.0
    %1845 = vmatprep.subr.mxu0 0.0
    %1846 = vmatpush1.msra.mxu0 0.0
    %1847 = vmatprep.subr.mxu0 0.0
    %1848 = vmatpush1.msra.mxu0 0.0
    %1849 = vmatprep.subr.mxu0 0.0
    %1850 = vmatpush1.msra.mxu0 0.0
    %1851 = vmatprep.subr.mxu0 0.0
    %1852 = vmatpush1.msra.mxu0 0.0
    %1853 = vmatprep.subr.mxu0 0.0
    %1854 = vmatpush1.msra.mxu0 0.0
    %1855 = vmatprep.subr.mxu0 0.0
    %1856 = vmatpush1.msra.mxu0 0.0
    %1857 = vmatprep.subr.mxu0 0.0
    %1858 = vmatpush1.msra.mxu0 0.0
    %1859 = vmatprep.subr.mxu0 0.0
    %1860 = vmatpush1.msra.mxu0 0.0
    %1861 = vmatprep.subr.mxu0 0.0
    %1862 = vmatpush1.msra.mxu0 0.0
    %1863 = vmatprep.subr.mxu0 0.0
    %1864 = vmatpush1.msra.mxu0 0.0
    %1865 = vmatprep.subr.mxu0 0.0
    %1866 = vmatpush1.msra.mxu0 0.0
    %1867 = vmatprep.subr.mxu0 0.0
    %1868 = vmatpush1.msra.mxu0 0.0
    %1869 = vmatprep.subr.mxu0 0.0
    %1870 = vmatpush1.msra.mxu0 0.0
    %1871 = vmatprep.subr.mxu0 0.0
    %1872 = vmatpush1.msra.mxu0 0.0
    %1873 = vmatprep.subr.mxu0 0.0
    %1874 = vmatpush1.msra.mxu0 0.0
    %1875 = vmatprep.subr.mxu0 0.0
    %1876 = vmatpush1.msra.mxu0 0.0
    %1877 = vmatprep.subr.mxu0 0.0
    %1878 = vmatpush1.msra.mxu0 0.0
    %1879 = vmatprep.subr.mxu0 0.0
    %1880 = vmatpush1.msra.mxu0 0.0
    %1881 = vmatprep.subr.mxu0 0.0
    %1882 = vmatpush1.msra.mxu0 0.0
    %1883 = vmatprep.subr.mxu0 0.0
    %1884 = vmatpush1.msra.mxu0 0.0
    %1885 = vmatprep.subr.mxu0 0.0
    %1886 = vmatpush1.msra.mxu0 0.0
    %1887 = vmatprep.subr.mxu0 0.0
    %1888 = vmatpush1.msra.mxu0 0.0
    %1889 = vmatprep.subr.mxu0 0.0
    %1890 = vmatpush1.msra.mxu0 0.0
    %1891 = vmatprep.subr.mxu0 0.0
    %1892 = vmatpush1.msra.mxu0 0.0
    %1893 = vmatprep.mubr.f32.mxu0 0.0
    %v1894 = vand.u32 %v1520, 4294901760
    %1895 = vmatmul.mubr.f32.gmra.mrb[0].mxu0 %v1894
    %v1896 = vpop.f32.mrb[0].mxu0
    %v1897 = vadd.f32 %v1823, %v1896
    %v1898 = vpop.f32.mrb[0].mxu0
    %1899 = vdwg.mxu0
    %1900 = vmatprep.subr.mxu0 0.0
    %v1901 = vand.u32 %v1524, 4294901760
    %1902 = vmatpush1.msra.mxu0 %v1901
    %1903 = vmatprep.subr.mxu0 0.0
    %1904 = vmatpush1.msra.mxu0 0.0
    %1905 = vmatprep.subr.mxu0 0.0
    %1906 = vmatpush1.msra.mxu0 0.0
    %1907 = vmatprep.subr.mxu0 0.0
    %1908 = vmatpush1.msra.mxu0 0.0
    %1909 = vmatprep.subr.mxu0 0.0
    %1910 = vmatpush1.msra.mxu0 0.0
    %1911 = vmatprep.subr.mxu0 0.0
    %1912 = vmatpush1.msra.mxu0 0.0
    %1913 = vmatprep.subr.mxu0 0.0
    %1914 = vmatpush1.msra.mxu0 0.0
    %1915 = vmatprep.subr.mxu0 0.0
    %1916 = vmatpush1.msra.mxu0 0.0
    %1917 = vmatprep.subr.mxu0 0.0
    %1918 = vmatpush1.msra.mxu0 0.0
    %1919 = vmatprep.subr.mxu0 0.0
    %1920 = vmatpush1.msra.mxu0 0.0
    %1921 = vmatprep.subr.mxu0 0.0
    %1922 = vmatpush1.msra.mxu0 0.0
    %1923 = vmatprep.subr.mxu0 0.0
    %1924 = vmatpush1.msra.mxu0 0.0
    %1925 = vmatprep.subr.mxu0 0.0
    %1926 = vmatpush1.msra.mxu0 0.0
    %1927 = vmatprep.subr.mxu0 0.0
    %1928 = vmatpush1.msra.mxu0 0.0
    %1929 = vmatprep.subr.mxu0 0.0
    %1930 = vmatpush1.msra.mxu0 0.0
    %1931 = vmatprep.subr.mxu0 0.0
    %1932 = vmatpush1.msra.mxu0 0.0
    %1933 = vmatprep.subr.mxu0 0.0
    %1934 = vmatpush1.msra.mxu0 0.0
    %1935 = vmatprep.subr.mxu0 0.0
    %1936 = vmatpush1.msra.mxu0 0.0
    %1937 = vmatprep.subr.mxu0 0.0
    %1938 = vmatpush1.msra.mxu0 0.0
    %1939 = vmatprep.subr.mxu0 0.0
    %1940 = vmatpush1.msra.mxu0 0.0
    %1941 = vmatprep.subr.mxu0 0.0
    %1942 = vmatpush1.msra.mxu0 0.0
    %1943 = vmatprep.subr.mxu0 0.0
    %1944 = vmatpush1.msra.mxu0 0.0
    %1945 = vmatprep.subr.mxu0 0.0
    %1946 = vmatpush1.msra.mxu0 0.0
    %1947 = vmatprep.subr.mxu0 0.0
    %1948 = vmatpush1.msra.mxu0 0.0
    %1949 = vmatprep.subr.mxu0 0.0
    %1950 = vmatpush1.msra.mxu0 0.0
    %1951 = vmatprep.subr.mxu0 0.0
    %1952 = vmatpush1.msra.mxu0 0.0
    %1953 = vmatprep.subr.mxu0 0.0
    %1954 = vmatpush1.msra.mxu0 0.0
    %1955 = vmatprep.subr.mxu0 0.0
    %1956 = vmatpush1.msra.mxu0 0.0
    %1957 = vmatprep.subr.mxu0 0.0
    %1958 = vmatpush1.msra.mxu0 0.0
    %1959 = vmatprep.subr.mxu0 0.0
    %1960 = vmatpush1.msra.mxu0 0.0
    %1961 = vmatprep.subr.mxu0 0.0
    %1962 = vmatpush1.msra.mxu0 0.0
    %1963 = vmatprep.subr.mxu0 0.0
    %1964 = vmatpush1.msra.mxu0 0.0
    %1965 = vmatprep.mubr.f32.mxu0 0.0
    %v1966 = vand.u32 %v1520, 4294901760
    %1967 = vmatmul.mubr.f32.gmra.mrb[0].mxu0 %v1966
    %v1968 = vpop.f32.mrb[0].mxu0
    %v1969 = vadd.f32 %v1897, %v1968
    %v1970 = vpop.f32.mrb[0].mxu0
    %1971 = vdwg.mxu0
    %v1972 = vmax.f32 %v1969, 0.0
    %v1973 = vld [vmem:[%s9] sm:$0x3]
    %v1974 = vld [vmem:[%s10] sm:$0x3]
    %1976 = vset.pattern.permute.xlu0 0
    %1977 = vperm.xlu0 %1976, %v1974
    %v1978 = vpop.permute.xlu0 %1977
    %vm1980 = vcmask 23552
    %v1982 = vsel %vm1980, %v1973, 0
    %vm1984 = vcmask 1042432
    %v1986 = vsel %vm1984, %v1972, 0
    %1988 = vmatprep.subr.mxu0 0.0
    %v1989 = vand.u32 %v1986, 4294901760
    %1990 = vmatpush1.msra.mxu0 %v1989
    %1991 = vmatprep.subr.mxu0 0.0
    %1992 = vmatpush1.msra.mxu0 0.0
    %1993 = vmatprep.subr.mxu0 0.0
    %1994 = vmatpush1.msra.mxu0 0.0
    %1995 = vmatprep.subr.mxu0 0.0
    %1996 = vmatpush1.msra.mxu0 0.0
    %1997 = vmatprep.subr.mxu0 0.0
    %1998 = vmatpush1.msra.mxu0 0.0
    %1999 = vmatprep.subr.mxu0 0.0
    %2000 = vmatpush1.msra.mxu0 0.0
    %2001 = vmatprep.subr.mxu0 0.0
    %2002 = vmatpush1.msra.mxu0 0.0
    %2003 = vmatprep.subr.mxu0 0.0
    %2004 = vmatpush1.msra.mxu0 0.0
    %2005 = vmatprep.subr.mxu0 0.0
    %2006 = vmatpush1.msra.mxu0 0.0
    %2007 = vmatprep.subr.mxu0 0.0
    %2008 = vmatpush1.msra.mxu0 0.0
    %2009 = vmatprep.subr.mxu0 0.0
    %2010 = vmatpush1.msra.mxu0 0.0
    %2011 = vmatprep.subr.mxu0 0.0
    %2012 = vmatpush1.msra.mxu0 0.0
    %2013 = vmatprep.subr.mxu0 0.0
    %2014 = vmatpush1.msra.mxu0 0.0
    %2015 = vmatprep.subr.mxu0 0.0
    %2016 = vmatpush1.msra.mxu0 0.0
    %2017 = vmatprep.subr.mxu0 0.0
    %2018 = vmatpush1.msra.mxu0 0.0
    %2019 = vmatprep.subr.mxu0 0.0
    %2020 = vmatpush1.msra.mxu0 0.0
    %2021 = vmatprep.subr.mxu0 0.0
    %2022 = vmatpush1.msra.mxu0 0.0
    %2023 = vmatprep.subr.mxu0 0.0
    %2024 = vmatpush1.msra.mxu0 0.0
    %2025 = vmatprep.subr.mxu0 0.0
    %2026 = vmatpush1.msra.mxu0 0.0
    %2027 = vmatprep.subr.mxu0 0.0
    %2028 = vmatpush1.msra.mxu0 0.0
    %2029 = vmatprep.subr.mxu0 0.0
    %2030 = vmatpush1.msra.mxu0 0.0
    %2031 = vmatprep.subr.mxu0 0.0
    %2032 = vmatpush1.msra.mxu0 0.0
    %2033 = vmatprep.subr.mxu0 0.0
    %2034 = vmatpush1.msra.mxu0 0.0
    %2035 = vmatprep.subr.mxu0 0.0
    %2036 = vmatpush1.msra.mxu0 0.0
    %2037 = vmatprep.subr.mxu0 0.0
    %2038 = vmatpush1.msra.mxu0 0.0
    %2039 = vmatprep.subr.mxu0 0.0
    %2040 = vmatpush1.msra.mxu0 0.0
    %2041 = vmatprep.subr.mxu0 0.0
    %2042 = vmatpush1.msra.mxu0 0.0
    %2043 = vmatprep.subr.mxu0 0.0
    %2044 = vmatpush1.msra.mxu0 0.0
    %2045 = vmatprep.subr.mxu0 0.0
    %2046 = vmatpush1.msra.mxu0 0.0
    %2047 = vmatprep.subr.mxu0 0.0
    %2048 = vmatpush1.msra.mxu0 0.0
    %2049 = vmatprep.subr.mxu0 0.0
    %2050 = vmatpush1.msra.mxu0 0.0
    %2051 = vmatprep.subr.mxu0 0.0
    %2052 = vmatpush1.msra.mxu0 0.0
    %2053 = vmatprep.mubr.f32.mxu0 0.0
    %v2054 = vand.u32 %v1982, 4294901760
    %v2055 = vsub.f32 %v1982, %v2054
    %v2056 = vand.u32 %v2055, 4294901760
    %v2057 = vsub.f32 %v2055, %v2056
    %v2058 = vand.u32 %v2057, 4294901760
    %2059 = vmatmul.mubr.f32.gmra.mrb[0].mxu0 %v2058
    %v2060 = vpop.f32.mrb[0].mxu0
    %v2061 = vadd.f32 %v1978, %v2060
    %v2062 = vpop.f32.mrb[0].mxu0
    %2063 = vdwg.mxu0
    %2064 = vmatprep.subr.mxu0 0.0
    %v2065 = vand.u32 %v1986, 4294901760
    %v2066 = vsub.f32 %v1986, %v2065
    %v2067 = vand.u32 %v2066, 4294901760
    %v2068 = vsub.f32 %v2066, %v2067
    %v2069 = vand.u32 %v2068, 4294901760
    %2070 = vmatpush1.msra.mxu0 %v2069
    %2071 = vmatprep.subr.mxu0 0.0
    %2072 = vmatpush1.msra.mxu0 0.0
    %2073 = vmatprep.subr.mxu0 0.0
    %2074 = vmatpush1.msra.mxu0 0.0
    %2075 = vmatprep.subr.mxu0 0.0
    %2076 = vmatpush1.msra.mxu0 0.0
    %2077 = vmatprep.subr.mxu0 0.0
    %2078 = vmatpush1.msra.mxu0 0.0
    %2079 = vmatprep.subr.mxu0 0.0
    %2080 = vmatpush1.msra.mxu0 0.0
    %2081 = vmatprep.subr.mxu0 0.0
    %2082 = vmatpush1.msra.mxu0 0.0
    %2083 = vmatprep.subr.mxu0 0.0
    %2084 = vmatpush1.msra.mxu0 0.0
    %2085 = vmatprep.subr.mxu0 0.0
    %2086 = vmatpush1.msra.mxu0 0.0
    %2087 = vmatprep.subr.mxu0 0.0
    %2088 = vmatpush1.msra.mxu0 0.0
    %2089 = vmatprep.subr.mxu0 0.0
    %2090 = vmatpush1.msra.mxu0 0.0
    %2091 = vmatprep.subr.mxu0 0.0
    %2092 = vmatpush1.msra.mxu0 0.0
    %2093 = vmatprep.subr.mxu0 0.0
    %2094 = vmatpush1.msra.mxu0 0.0
    %2095 = vmatprep.subr.mxu0 0.0
    %2096 = vmatpush1.msra.mxu0 0.0
    %2097 = vmatprep.subr.mxu0 0.0
    %2098 = vmatpush1.msra.mxu0 0.0
    %2099 = vmatprep.subr.mxu0 0.0
    %2100 = vmatpush1.msra.mxu0 0.0
    %2101 = vmatprep.subr.mxu0 0.0
    %2102 = vmatpush1.msra.mxu0 0.0
    %2103 = vmatprep.subr.mxu0 0.0
    %2104 = vmatpush1.msra.mxu0 0.0
    %2105 = vmatprep.subr.mxu0 0.0
    %2106 = vmatpush1.msra.mxu0 0.0
    %2107 = vmatprep.subr.mxu0 0.0
    %2108 = vmatpush1.msra.mxu0 0.0
    %2109 = vmatprep.subr.mxu0 0.0
    %2110 = vmatpush1.msra.mxu0 0.0
    %2111 = vmatprep.subr.mxu0 0.0
    %2112 = vmatpush1.msra.mxu0 0.0
    %2113 = vmatprep.subr.mxu0 0.0
    %2114 = vmatpush1.msra.mxu0 0.0
    %2115 = vmatprep.subr.mxu0 0.0
    %2116 = vmatpush1.msra.mxu0 0.0
    %2117 = vmatprep.subr.mxu0 0.0
    %2118 = vmatpush1.msra.mxu0 0.0
    %2119 = vmatprep.subr.mxu0 0.0
    %2120 = vmatpush1.msra.mxu0 0.0
    %2121 = vmatprep.subr.mxu0 0.0
    %2122 = vmatpush1.msra.mxu0 0.0
    %2123 = vmatprep.subr.mxu0 0.0
    %2124 = vmatpush1.msra.mxu0 0.0
    %2125 = vmatprep.subr.mxu0 0.0
    %2126 = vmatpush1.msra.mxu0 0.0
    %2127 = vmatprep.subr.mxu0 0.0
    %2128 = vmatpush1.msra.mxu0 0.0
    %2129 = vmatprep.subr.mxu0 0.0
    %2130 = vmatpush1.msra.mxu0 0.0
    %2131 = vmatprep.subr.mxu0 0.0
    %2132 = vmatpush1.msra.mxu0 0.0
    %2133 = vmatprep.mubr.f32.mxu0 0.0
    %v2134 = vand.u32 %v1982, 4294901760
    %2135 = vmatmul.mubr.f32.gmra.mrb[0].mxu0 %v2134
    %v2136 = vpop.f32.mrb[0].mxu0
    %v2137 = vadd.f32 %v2061, %v2136
    %v2138 = vpop.f32.mrb[0].mxu0
    %2139 = vdwg.mxu0
    %2140 = vmatprep.subr.mxu0 0.0
    %v2141 = vand.u32 %v1986, 4294901760
    %v2142 = vsub.f32 %v1986, %v2141
    %2143 = vmatpush1.msra.mxu0 %v2142
    %2144 = vmatprep.subr.mxu0 0.0
    %2145 = vmatpush1.msra.mxu0 0.0
    %2146 = vmatprep.subr.mxu0 0.0
    %2147 = vmatpush1.msra.mxu0 0.0
    %2148 = vmatprep.subr.mxu0 0.0
    %2149 = vmatpush1.msra.mxu0 0.0
    %2150 = vmatprep.subr.mxu0 0.0
    %2151 = vmatpush1.msra.mxu0 0.0
    %2152 = vmatprep.subr.mxu0 0.0
    %2153 = vmatpush1.msra.mxu0 0.0
    %2154 = vmatprep.subr.mxu0 0.0
    %2155 = vmatpush1.msra.mxu0 0.0
    %2156 = vmatprep.subr.mxu0 0.0
    %2157 = vmatpush1.msra.mxu0 0.0
    %2158 = vmatprep.subr.mxu0 0.0
    %2159 = vmatpush1.msra.mxu0 0.0
    %2160 = vmatprep.subr.mxu0 0.0
    %2161 = vmatpush1.msra.mxu0 0.0
    %2162 = vmatprep.subr.mxu0 0.0
    %2163 = vmatpush1.msra.mxu0 0.0
    %2164 = vmatprep.subr.mxu0 0.0
    %2165 = vmatpush1.msra.mxu0 0.0
    %2166 = vmatprep.subr.mxu0 0.0
    %2167 = vmatpush1.msra.mxu0 0.0
    %2168 = vmatprep.subr.mxu0 0.0
    %2169 = vmatpush1.msra.mxu0 0.0
    %2170 = vmatprep.subr.mxu0 0.0
    %2171 = vmatpush1.msra.mxu0 0.0
    %2172 = vmatprep.subr.mxu0 0.0
    %2173 = vmatpush1.msra.mxu0 0.0
    %2174 = vmatprep.subr.mxu0 0.0
    %2175 = vmatpush1.msra.mxu0 0.0
    %2176 = vmatprep.subr.mxu0 0.0
    %2177 = vmatpush1.msra.mxu0 0.0
    %2178 = vmatprep.subr.mxu0 0.0
    %2179 = vmatpush1.msra.mxu0 0.0
    %2180 = vmatprep.subr.mxu0 0.0
    %2181 = vmatpush1.msra.mxu0 0.0
    %2182 = vmatprep.subr.mxu0 0.0
    %2183 = vmatpush1.msra.mxu0 0.0
    %2184 = vmatprep.subr.mxu0 0.0
    %2185 = vmatpush1.msra.mxu0 0.0
    %2186 = vmatprep.subr.mxu0 0.0
    %2187 = vmatpush1.msra.mxu0 0.0
    %2188 = vmatprep.subr.mxu0 0.0
    %2189 = vmatpush1.msra.mxu0 0.0
    %2190 = vmatprep.subr.mxu0 0.0
    %2191 = vmatpush1.msra.mxu0 0.0
    %2192 = vmatprep.subr.mxu0 0.0
    %2193 = vmatpush1.msra.mxu0 0.0
    %2194 = vmatprep.subr.mxu0 0.0
    %2195 = vmatpush1.msra.mxu0 0.0
    %2196 = vmatprep.subr.mxu0 0.0
    %2197 = vmatpush1.msra.mxu0 0.0
    %2198 = vmatprep.subr.mxu0 0.0
    %2199 = vmatpush1.msra.mxu0 0.0
    %2200 = vmatprep.subr.mxu0 0.0
    %2201 = vmatpush1.msra.mxu0 0.0
    %2202 = vmatprep.subr.mxu0 0.0
    %2203 = vmatpush1.msra.mxu0 0.0
    %2204 = vmatprep.subr.mxu0 0.0
    %2205 = vmatpush1.msra.mxu0 0.0
    %2206 = vmatprep.mubr.f32.mxu0 0.0
    %v2207 = vand.u32 %v1982, 4294901760
    %v2208 = vsub.f32 %v1982, %v2207
    %2209 = vmatmul.mubr.f32.gmra.mrb[0].mxu0 %v2208
    %v2210 = vpop.f32.mrb[0].mxu0
    %v2211 = vadd.f32 %v2137, %v2210
    %v2212 = vpop.f32.mrb[0].mxu0
    %2213 = vdwg.mxu0
    %2214 = vmatprep.subr.mxu0 0.0
    %v2215 = vand.u32 %v1986, 4294901760
    %2216 = vmatpush1.msra.mxu0 %v2215
    %2217 = vmatprep.subr.mxu0 0.0
    %2218 = vmatpush1.msra.mxu0 0.0
    %2219 = vmatprep.subr.mxu0 0.0
    %2220 = vmatpush1.msra.mxu0 0.0
    %2221 = vmatprep.subr.mxu0 0.0
    %2222 = vmatpush1.msra.mxu0 0.0
    %2223 = vmatprep.subr.mxu0 0.0
    %2224 = vmatpush1.msra.mxu0 0.0
    %2225 = vmatprep.subr.mxu0 0.0
    %2226 = vmatpush1.msra.mxu0 0.0
    %2227 = vmatprep.subr.mxu0 0.0
    %2228 = vmatpush1.msra.mxu0 0.0
    %2229 = vmatprep.subr.mxu0 0.0
    %2230 = vmatpush1.msra.mxu0 0.0
    %2231 = vmatprep.subr.mxu0 0.0
    %2232 = vmatpush1.msra.mxu0 0.0
    %2233 = vmatprep.subr.mxu0 0.0
    %2234 = vmatpush1.msra.mxu0 0.0
    %2235 = vmatprep.subr.mxu0 0.0
    %2236 = vmatpush1.msra.mxu0 0.0
    %2237 = vmatprep.subr.mxu0 0.0
    %2238 = vmatpush1.msra.mxu0 0.0
    %2239 = vmatprep.subr.mxu0 0.0
    %2240 = vmatpush1.msra.mxu0 0.0
    %2241 = vmatprep.subr.mxu0 0.0
    %2242 = vmatpush1.msra.mxu0 0.0
    %2243 = vmatprep.subr.mxu0 0.0
    %2244 = vmatpush1.msra.mxu0 0.0
    %2245 = vmatprep.subr.mxu0 0.0
    %2246 = vmatpush1.msra.mxu0 0.0
    %2247 = vmatprep.subr.mxu0 0.0
    %2248 = vmatpush1.msra.mxu0 0.0
    %2249 = vmatprep.subr.mxu0 0.0
    %2250 = vmatpush1.msra.mxu0 0.0
    %2251 = vmatprep.subr.mxu0 0.0
    %2252 = vmatpush1.msra.mxu0 0.0
    %2253 = vmatprep.subr.mxu0 0.0
    %2254 = vmatpush1.msra.mxu0 0.0
    %2255 = vmatprep.subr.mxu0 0.0
    %2256 = vmatpush1.msra.mxu0 0.0
    %2257 = vmatprep.subr.mxu0 0.0
    %2258 = vmatpush1.msra.mxu0 0.0
    %2259 = vmatprep.subr.mxu0 0.0
    %2260 = vmatpush1.msra.mxu0 0.0
    %2261 = vmatprep.subr.mxu0 0.0
    %2262 = vmatpush1.msra.mxu0 0.0
    %2263 = vmatprep.subr.mxu0 0.0
    %2264 = vmatpush1.msra.mxu0 0.0
    %2265 = vmatprep.subr.mxu0 0.0
    %2266 = vmatpush1.msra.mxu0 0.0
    %2267 = vmatprep.subr.mxu0 0.0
    %2268 = vmatpush1.msra.mxu0 0.0
    %2269 = vmatprep.subr.mxu0 0.0
    %2270 = vmatpush1.msra.mxu0 0.0
    %2271 = vmatprep.subr.mxu0 0.0
    %2272 = vmatpush1.msra.mxu0 0.0
    %2273 = vmatprep.subr.mxu0 0.0
    %2274 = vmatpush1.msra.mxu0 0.0
    %2275 = vmatprep.subr.mxu0 0.0
    %2276 = vmatpush1.msra.mxu0 0.0
    %2277 = vmatprep.subr.mxu0 0.0
    %2278 = vmatpush1.msra.mxu0 0.0
    %2279 = vmatprep.mubr.f32.mxu0 0.0
    %v2280 = vand.u32 %v1982, 4294901760
    %v2281 = vsub.f32 %v1982, %v2280
    %v2282 = vand.u32 %v2281, 4294901760
    %2283 = vmatmul.mubr.f32.gmra.mrb[0].mxu0 %v2282
    %v2284 = vpop.f32.mrb[0].mxu0
    %v2285 = vadd.f32 %v2211, %v2284
    %v2286 = vpop.f32.mrb[0].mxu0
    %2287 = vdwg.mxu0
    %2288 = vmatprep.subr.mxu0 0.0
    %v2289 = vand.u32 %v1986, 4294901760
    %v2290 = vsub.f32 %v1986, %v2289
    %v2291 = vand.u32 %v2290, 4294901760
    %2292 = vmatpush1.msra.mxu0 %v2291
    %2293 = vmatprep.subr.mxu0 0.0
    %2294 = vmatpush1.msra.mxu0 0.0
    %2295 = vmatprep.subr.mxu0 0.0
    %2296 = vmatpush1.msra.mxu0 0.0
    %2297 = vmatprep.subr.mxu0 0.0
    %2298 = vmatpush1.msra.mxu0 0.0
    %2299 = vmatprep.subr.mxu0 0.0
    %2300 = vmatpush1.msra.mxu0 0.0
    %2301 = vmatprep.subr.mxu0 0.0
    %2302 = vmatpush1.msra.mxu0 0.0
    %2303 = vmatprep.subr.mxu0 0.0
    %2304 = vmatpush1.msra.mxu0 0.0
    %2305 = vmatprep.subr.mxu0 0.0
    %2306 = vmatpush1.msra.mxu0 0.0
    %2307 = vmatprep.subr.mxu0 0.0
    %2308 = vmatpush1.msra.mxu0 0.0
    %2309 = vmatprep.subr.mxu0 0.0
    %2310 = vmatpush1.msra.mxu0 0.0
    %2311 = vmatprep.subr.mxu0 0.0
    %2312 = vmatpush1.msra.mxu0 0.0
    %2313 = vmatprep.subr.mxu0 0.0
    %2314 = vmatpush1.msra.mxu0 0.0
    %2315 = vmatprep.subr.mxu0 0.0
    %2316 = vmatpush1.msra.mxu0 0.0
    %2317 = vmatprep.subr.mxu0 0.0
    %2318 = vmatpush1.msra.mxu0 0.0
    %2319 = vmatprep.subr.mxu0 0.0
    %2320 = vmatpush1.msra.mxu0 0.0
    %2321 = vmatprep.subr.mxu0 0.0
    %2322 = vmatpush1.msra.mxu0 0.0
    %2323 = vmatprep.subr.mxu0 0.0
    %2324 = vmatpush1.msra.mxu0 0.0
    %2325 = vmatprep.subr.mxu0 0.0
    %2326 = vmatpush1.msra.mxu0 0.0
    %2327 = vmatprep.subr.mxu0 0.0
    %2328 = vmatpush1.msra.mxu0 0.0
    %2329 = vmatprep.subr.mxu0 0.0
    %2330 = vmatpush1.msra.mxu0 0.0
    %2331 = vmatprep.subr.mxu0 0.0
    %2332 = vmatpush1.msra.mxu0 0.0
    %2333 = vmatprep.subr.mxu0 0.0
    %2334 = vmatpush1.msra.mxu0 0.0
    %2335 = vmatprep.subr.mxu0 0.0
    %2336 = vmatpush1.msra.mxu0 0.0
    %2337 = vmatprep.subr.mxu0 0.0
    %2338 = vmatpush1.msra.mxu0 0.0
    %2339 = vmatprep.subr.mxu0 0.0
    %2340 = vmatpush1.msra.mxu0 0.0
    %2341 = vmatprep.subr.mxu0 0.0
    %2342 = vmatpush1.msra.mxu0 0.0
    %2343 = vmatprep.subr.mxu0 0.0
    %2344 = vmatpush1.msra.mxu0 0.0
    %2345 = vmatprep.subr.mxu0 0.0
    %2346 = vmatpush1.msra.mxu0 0.0
    %2347 = vmatprep.subr.mxu0 0.0
    %2348 = vmatpush1.msra.mxu0 0.0
    %2349 = vmatprep.subr.mxu0 0.0
    %2350 = vmatpush1.msra.mxu0 0.0
    %2351 = vmatprep.subr.mxu0 0.0
    %2352 = vmatpush1.msra.mxu0 0.0
    %2353 = vmatprep.subr.mxu0 0.0
    %2354 = vmatpush1.msra.mxu0 0.0
    %2355 = vmatprep.mubr.f32.mxu0 0.0
    %v2356 = vand.u32 %v1982, 4294901760
    %2357 = vmatmul.mubr.f32.gmra.mrb[0].mxu0 %v2356
    %v2358 = vpop.f32.mrb[0].mxu0
    %v2359 = vadd.f32 %v2285, %v2358
    %v2360 = vpop.f32.mrb[0].mxu0
    %2361 = vdwg.mxu0
    %2362 = vmatprep.subr.mxu0 0.0
    %v2363 = vand.u32 %v1986, 4294901760
    %2364 = vmatpush1.msra.mxu0 %v2363
    %2365 = vmatprep.subr.mxu0 0.0
    %2366 = vmatpush1.msra.mxu0 0.0
    %2367 = vmatprep.subr.mxu0 0.0
    %2368 = vmatpush1.msra.mxu0 0.0
    %2369 = vmatprep.subr.mxu0 0.0
    %2370 = vmatpush1.msra.mxu0 0.0
    %2371 = vmatprep.subr.mxu0 0.0
    %2372 = vmatpush1.msra.mxu0 0.0
    %2373 = vmatprep.subr.mxu0 0.0
    %2374 = vmatpush1.msra.mxu0 0.0
    %2375 = vmatprep.subr.mxu0 0.0
    %2376 = vmatpush1.msra.mxu0 0.0
    %2377 = vmatprep.subr.mxu0 0.0
    %2378 = vmatpush1.msra.mxu0 0.0
    %2379 = vmatprep.subr.mxu0 0.0
    %2380 = vmatpush1.msra.mxu0 0.0
    %2381 = vmatprep.subr.mxu0 0.0
    %2382 = vmatpush1.msra.mxu0 0.0
    %2383 = vmatprep.subr.mxu0 0.0
    %2384 = vmatpush1.msra.mxu0 0.0
    %2385 = vmatprep.subr.mxu0 0.0
    %2386 = vmatpush1.msra.mxu0 0.0
    %2387 = vmatprep.subr.mxu0 0.0
    %2388 = vmatpush1.msra.mxu0 0.0
    %2389 = vmatprep.subr.mxu0 0.0
    %2390 = vmatpush1.msra.mxu0 0.0
    %2391 = vmatprep.subr.mxu0 0.0
    %2392 = vmatpush1.msra.mxu0 0.0
    %2393 = vmatprep.subr.mxu0 0.0
    %2394 = vmatpush1.msra.mxu0 0.0
    %2395 = vmatprep.subr.mxu0 0.0
    %2396 = vmatpush1.msra.mxu0 0.0
    %2397 = vmatprep.subr.mxu0 0.0
    %2398 = vmatpush1.msra.mxu0 0.0
    %2399 = vmatprep.subr.mxu0 0.0
    %2400 = vmatpush1.msra.mxu0 0.0
    %2401 = vmatprep.subr.mxu0 0.0
    %2402 = vmatpush1.msra.mxu0 0.0
    %2403 = vmatprep.subr.mxu0 0.0
    %2404 = vmatpush1.msra.mxu0 0.0
    %2405 = vmatprep.subr.mxu0 0.0
    %2406 = vmatpush1.msra.mxu0 0.0
    %2407 = vmatprep.subr.mxu0 0.0
    %2408 = vmatpush1.msra.mxu0 0.0
    %2409 = vmatprep.subr.mxu0 0.0
    %2410 = vmatpush1.msra.mxu0 0.0
    %2411 = vmatprep.subr.mxu0 0.0
    %2412 = vmatpush1.msra.mxu0 0.0
    %2413 = vmatprep.subr.mxu0 0.0
    %2414 = vmatpush1.msra.mxu0 0.0
    %2415 = vmatprep.subr.mxu0 0.0
    %2416 = vmatpush1.msra.mxu0 0.0
    %2417 = vmatprep.subr.mxu0 0.0
    %2418 = vmatpush1.msra.mxu0 0.0
    %2419 = vmatprep.subr.mxu0 0.0
    %2420 = vmatpush1.msra.mxu0 0.0
    %2421 = vmatprep.subr.mxu0 0.0
    %2422 = vmatpush1.msra.mxu0 0.0
    %2423 = vmatprep.subr.mxu0 0.0
    %2424 = vmatpush1.msra.mxu0 0.0
    %2425 = vmatprep.subr.mxu0 0.0
    %2426 = vmatpush1.msra.mxu0 0.0
    %2427 = vmatprep.mubr.f32.mxu0 0.0
    %v2428 = vand.u32 %v1982, 4294901760
    %2429 = vmatmul.mubr.f32.gmra.mrb[0].mxu0 %v2428
    %v2430 = vpop.f32.mrb[0].mxu0
    %v2431 = vadd.f32 %v2359, %v2430
    %v2432 = vpop.f32.mrb[0].mxu0
    %2433 = vdwg.mxu0
    %v2434 = vmax.f32 %v2431, 0.0
    %v2435 = vld [vmem:[%s11] sm:$0x1]
    %v2436 = vld [vmem:[#allocation2] sm:$0x1]
    %2438 = vset.pattern.permute.xlu0 0
    %2439 = vperm.xlu0 %2438, %v2436
    %v2440 = vpop.permute.xlu0 %2439
    %v2442 = vlaneseq
    %v2443 = vshrl.u32 %v2442, 7
    %v2444 = vsub.s32 0, %v2443
    %v2445 = vrot.slane %v2440, %v2444
    %vm2446 = vcmask 15360
    %v2448 = vsel %vm2446, %v2435, 0
    %v2451 = vsel %vm585, %v2434, 0
    %2453 = vmatprep.subr.mxu0 0.0
    %v2454 = vand.u32 %v2451, 4294901760
    %2455 = vmatpush1.msra.mxu0 %v2454
    %2456 = vmatprep.subr.mxu0 0.0
    %2457 = vmatpush1.msra.mxu0 0.0
    %2458 = vmatprep.subr.mxu0 0.0
    %2459 = vmatpush1.msra.mxu0 0.0
    %2460 = vmatprep.subr.mxu0 0.0
    %2461 = vmatpush1.msra.mxu0 0.0
    %2462 = vmatprep.subr.mxu0 0.0
    %2463 = vmatpush1.msra.mxu0 0.0
    %2464 = vmatprep.subr.mxu0 0.0
    %2465 = vmatpush1.msra.mxu0 0.0
    %2466 = vmatprep.subr.mxu0 0.0
    %2467 = vmatpush1.msra.mxu0 0.0
    %2468 = vmatprep.subr.mxu0 0.0
    %2469 = vmatpush1.msra.mxu0 0.0
    %2470 = vmatprep.subr.mxu0 0.0
    %2471 = vmatpush1.msra.mxu0 0.0
    %2472 = vmatprep.subr.mxu0 0.0
    %2473 = vmatpush1.msra.mxu0 0.0
    %2474 = vmatprep.subr.mxu0 0.0
    %2475 = vmatpush1.msra.mxu0 0.0
    %2476 = vmatprep.subr.mxu0 0.0
    %2477 = vmatpush1.msra.mxu0 0.0
    %2478 = vmatprep.subr.mxu0 0.0
    %2479 = vmatpush1.msra.mxu0 0.0
    %2480 = vmatprep.subr.mxu0 0.0
    %2481 = vmatpush1.msra.mxu0 0.0
    %2482 = vmatprep.subr.mxu0 0.0
    %2483 = vmatpush1.msra.mxu0 0.0
    %2484 = vmatprep.subr.mxu0 0.0
    %2485 = vmatpush1.msra.mxu0 0.0
    %2486 = vmatprep.subr.mxu0 0.0
    %2487 = vmatpush1.msra.mxu0 0.0
    %2488 = vmatprep.subr.mxu0 0.0
    %2489 = vmatpush1.msra.mxu0 0.0
    %2490 = vmatprep.subr.mxu0 0.0
    %2491 = vmatpush1.msra.mxu0 0.0
    %2492 = vmatprep.subr.mxu0 0.0
    %2493 = vmatpush1.msra.mxu0 0.0
    %2494 = vmatprep.subr.mxu0 0.0
    %2495 = vmatpush1.msra.mxu0 0.0
    %2496 = vmatprep.subr.mxu0 0.0
    %2497 = vmatpush1.msra.mxu0 0.0
    %2498 = vmatprep.subr.mxu0 0.0
    %2499 = vmatpush1.msra.mxu0 0.0
    %2500 = vmatprep.subr.mxu0 0.0
    %2501 = vmatpush1.msra.mxu0 0.0
    %2502 = vmatprep.subr.mxu0 0.0
    %2503 = vmatpush1.msra.mxu0 0.0
    %2504 = vmatprep.subr.mxu0 0.0
    %2505 = vmatpush1.msra.mxu0 0.0
    %2506 = vmatprep.subr.mxu0 0.0
    %2507 = vmatpush1.msra.mxu0 0.0
    %2508 = vmatprep.subr.mxu0 0.0
    %2509 = vmatpush1.msra.mxu0 0.0
    %2510 = vmatprep.subr.mxu0 0.0
    %2511 = vmatpush1.msra.mxu0 0.0
    %2512 = vmatprep.subr.mxu0 0.0
    %2513 = vmatpush1.msra.mxu0 0.0
    %2514 = vmatprep.subr.mxu0 0.0
    %2515 = vmatpush1.msra.mxu0 0.0
    %2516 = vmatprep.subr.mxu0 0.0
    %2517 = vmatpush1.msra.mxu0 0.0
    %2518 = vmatprep.mubr.f32.mxu0 0.0
    %v2519 = vand.u32 %v2448, 4294901760
    %v2520 = vsub.f32 %v2448, %v2519
    %v2521 = vand.u32 %v2520, 4294901760
    %v2522 = vsub.f32 %v2520, %v2521
    %v2523 = vand.u32 %v2522, 4294901760
    %2524 = vmatmul.mubr.f32.gmra.mrb[0].mxu0 %v2523
    %v2525 = vpop.f32.mrb[0].mxu0
    %v2526 = vadd.f32 %v2445, %v2525
    %v2527 = vpop.f32.mrb[0].mxu0
    %2528 = vdwg.mxu0
    %2529 = vmatprep.subr.mxu0 0.0
    %v2530 = vand.u32 %v2451, 4294901760
    %v2531 = vsub.f32 %v2451, %v2530
    %v2532 = vand.u32 %v2531, 4294901760
    %v2533 = vsub.f32 %v2531, %v2532
    %v2534 = vand.u32 %v2533, 4294901760
    %2535 = vmatpush1.msra.mxu0 %v2534
    %2536 = vmatprep.subr.mxu0 0.0
    %2537 = vmatpush1.msra.mxu0 0.0
    %2538 = vmatprep.subr.mxu0 0.0
    %2539 = vmatpush1.msra.mxu0 0.0
    %2540 = vmatprep.subr.mxu0 0.0
    %2541 = vmatpush1.msra.mxu0 0.0
    %2542 = vmatprep.subr.mxu0 0.0
    %2543 = vmatpush1.msra.mxu0 0.0
    %2544 = vmatprep.subr.mxu0 0.0
    %2545 = vmatpush1.msra.mxu0 0.0
    %2546 = vmatprep.subr.mxu0 0.0
    %2547 = vmatpush1.msra.mxu0 0.0
    %2548 = vmatprep.subr.mxu0 0.0
    %2549 = vmatpush1.msra.mxu0 0.0
    %2550 = vmatprep.subr.mxu0 0.0
    %2551 = vmatpush1.msra.mxu0 0.0
    %2552 = vmatprep.subr.mxu0 0.0
    %2553 = vmatpush1.msra.mxu0 0.0
    %2554 = vmatprep.subr.mxu0 0.0
    %2555 = vmatpush1.msra.mxu0 0.0
    %2556 = vmatprep.subr.mxu0 0.0
    %2557 = vmatpush1.msra.mxu0 0.0
    %2558 = vmatprep.subr.mxu0 0.0
    %2559 = vmatpush1.msra.mxu0 0.0
    %2560 = vmatprep.subr.mxu0 0.0
    %2561 = vmatpush1.msra.mxu0 0.0
    %2562 = vmatprep.subr.mxu0 0.0
    %2563 = vmatpush1.msra.mxu0 0.0
    %2564 = vmatprep.subr.mxu0 0.0
    %2565 = vmatpush1.msra.mxu0 0.0
    %2566 = vmatprep.subr.mxu0 0.0
    %2567 = vmatpush1.msra.mxu0 0.0
    %2568 = vmatprep.subr.mxu0 0.0
    %2569 = vmatpush1.msra.mxu0 0.0
    %2570 = vmatprep.subr.mxu0 0.0
    %2571 = vmatpush1.msra.mxu0 0.0
    %2572 = vmatprep.subr.mxu0 0.0
    %2573 = vmatpush1.msra.mxu0 0.0
    %2574 = vmatprep.subr.mxu0 0.0
    %2575 = vmatpush1.msra.mxu0 0.0
    %2576 = vmatprep.subr.mxu0 0.0
    %2577 = vmatpush1.msra.mxu0 0.0
    %2578 = vmatprep.subr.mxu0 0.0
    %2579 = vmatpush1.msra.mxu0 0.0
    %2580 = vmatprep.subr.mxu0 0.0
    %2581 = vmatpush1.msra.mxu0 0.0
    %2582 = vmatprep.subr.mxu0 0.0
    %2583 = vmatpush1.msra.mxu0 0.0
    %2584 = vmatprep.subr.mxu0 0.0
    %2585 = vmatpush1.msra.mxu0 0.0
    %2586 = vmatprep.subr.mxu0 0.0
    %2587 = vmatpush1.msra.mxu0 0.0
    %2588 = vmatprep.subr.mxu0 0.0
    %2589 = vmatpush1.msra.mxu0 0.0
    %2590 = vmatprep.subr.mxu0 0.0
    %2591 = vmatpush1.msra.mxu0 0.0
    %2592 = vmatprep.subr.mxu0 0.0
    %2593 = vmatpush1.msra.mxu0 0.0
    %2594 = vmatprep.subr.mxu0 0.0
    %2595 = vmatpush1.msra.mxu0 0.0
    %2596 = vmatprep.subr.mxu0 0.0
    %2597 = vmatpush1.msra.mxu0 0.0
    %2598 = vmatprep.mubr.f32.mxu0 0.0
    %v2599 = vand.u32 %v2448, 4294901760
    %2600 = vmatmul.mubr.f32.gmra.mrb[0].mxu0 %v2599
    %v2601 = vpop.f32.mrb[0].mxu0
    %v2602 = vadd.f32 %v2526, %v2601
    %v2603 = vpop.f32.mrb[0].mxu0
    %2604 = vdwg.mxu0
    %2605 = vmatprep.subr.mxu0 0.0
    %v2606 = vand.u32 %v2451, 4294901760
    %v2607 = vsub.f32 %v2451, %v2606
    %2608 = vmatpush1.msra.mxu0 %v2607
    %2609 = vmatprep.subr.mxu0 0.0
    %2610 = vmatpush1.msra.mxu0 0.0
    %2611 = vmatprep.subr.mxu0 0.0
    %2612 = vmatpush1.msra.mxu0 0.0
    %2613 = vmatprep.subr.mxu0 0.0
    %2614 = vmatpush1.msra.mxu0 0.0
    %2615 = vmatprep.subr.mxu0 0.0
    %2616 = vmatpush1.msra.mxu0 0.0
    %2617 = vmatprep.subr.mxu0 0.0
    %2618 = vmatpush1.msra.mxu0 0.0
    %2619 = vmatprep.subr.mxu0 0.0
    %2620 = vmatpush1.msra.mxu0 0.0
    %2621 = vmatprep.subr.mxu0 0.0
    %2622 = vmatpush1.msra.mxu0 0.0
    %2623 = vmatprep.subr.mxu0 0.0
    %2624 = vmatpush1.msra.mxu0 0.0
    %2625 = vmatprep.subr.mxu0 0.0
    %2626 = vmatpush1.msra.mxu0 0.0
    %2627 = vmatprep.subr.mxu0 0.0
    %2628 = vmatpush1.msra.mxu0 0.0
    %2629 = vmatprep.subr.mxu0 0.0
    %2630 = vmatpush1.msra.mxu0 0.0
    %2631 = vmatprep.subr.mxu0 0.0
    %2632 = vmatpush1.msra.mxu0 0.0
    %2633 = vmatprep.subr.mxu0 0.0
    %2634 = vmatpush1.msra.mxu0 0.0
    %2635 = vmatprep.subr.mxu0 0.0
    %2636 = vmatpush1.msra.mxu0 0.0
    %2637 = vmatprep.subr.mxu0 0.0
    %2638 = vmatpush1.msra.mxu0 0.0
    %2639 = vmatprep.subr.mxu0 0.0
    %2640 = vmatpush1.msra.mxu0 0.0
    %2641 = vmatprep.subr.mxu0 0.0
    %2642 = vmatpush1.msra.mxu0 0.0
    %2643 = vmatprep.subr.mxu0 0.0
    %2644 = vmatpush1.msra.mxu0 0.0
    %2645 = vmatprep.subr.mxu0 0.0
    %2646 = vmatpush1.msra.mxu0 0.0
    %2647 = vmatprep.subr.mxu0 0.0
    %2648 = vmatpush1.msra.mxu0 0.0
    %2649 = vmatprep.subr.mxu0 0.0
    %2650 = vmatpush1.msra.mxu0 0.0
    %2651 = vmatprep.subr.mxu0 0.0
    %2652 = vmatpush1.msra.mxu0 0.0
    %2653 = vmatprep.subr.mxu0 0.0
    %2654 = vmatpush1.msra.mxu0 0.0
    %2655 = vmatprep.subr.mxu0 0.0
    %2656 = vmatpush1.msra.mxu0 0.0
    %2657 = vmatprep.subr.mxu0 0.0
    %2658 = vmatpush1.msra.mxu0 0.0
    %2659 = vmatprep.subr.mxu0 0.0
    %2660 = vmatpush1.msra.mxu0 0.0
    %2661 = vmatprep.subr.mxu0 0.0
    %2662 = vmatpush1.msra.mxu0 0.0
    %2663 = vmatprep.subr.mxu0 0.0
    %2664 = vmatpush1.msra.mxu0 0.0
    %2665 = vmatprep.subr.mxu0 0.0
    %2666 = vmatpush1.msra.mxu0 0.0
    %2667 = vmatprep.subr.mxu0 0.0
    %2668 = vmatpush1.msra.mxu0 0.0
    %2669 = vmatprep.subr.mxu0 0.0
    %2670 = vmatpush1.msra.mxu0 0.0
    %2671 = vmatprep.mubr.f32.mxu0 0.0
    %v2672 = vand.u32 %v2448, 4294901760
    %v2673 = vsub.f32 %v2448, %v2672
    %2674 = vmatmul.mubr.f32.gmra.mrb[0].mxu0 %v2673
    %v2675 = vpop.f32.mrb[0].mxu0
    %v2676 = vadd.f32 %v2602, %v2675
    %v2677 = vpop.f32.mrb[0].mxu0
    %2678 = vdwg.mxu0
    %2679 = vmatprep.subr.mxu0 0.0
    %v2680 = vand.u32 %v2451, 4294901760
    %2681 = vmatpush1.msra.mxu0 %v2680
    %2682 = vmatprep.subr.mxu0 0.0
    %2683 = vmatpush1.msra.mxu0 0.0
    %2684 = vmatprep.subr.mxu0 0.0
    %2685 = vmatpush1.msra.mxu0 0.0
    %2686 = vmatprep.subr.mxu0 0.0
    %2687 = vmatpush1.msra.mxu0 0.0
    %2688 = vmatprep.subr.mxu0 0.0
    %2689 = vmatpush1.msra.mxu0 0.0
    %2690 = vmatprep.subr.mxu0 0.0
    %2691 = vmatpush1.msra.mxu0 0.0
    %2692 = vmatprep.subr.mxu0 0.0
    %2693 = vmatpush1.msra.mxu0 0.0
    %2694 = vmatprep.subr.mxu0 0.0
    %2695 = vmatpush1.msra.mxu0 0.0
    %2696 = vmatprep.subr.mxu0 0.0
    %2697 = vmatpush1.msra.mxu0 0.0
    %2698 = vmatprep.subr.mxu0 0.0
    %2699 = vmatpush1.msra.mxu0 0.0
    %2700 = vmatprep.subr.mxu0 0.0
    %2701 = vmatpush1.msra.mxu0 0.0
    %2702 = vmatprep.subr.mxu0 0.0
    %2703 = vmatpush1.msra.mxu0 0.0
    %2704 = vmatprep.subr.mxu0 0.0
    %2705 = vmatpush1.msra.mxu0 0.0
    %2706 = vmatprep.subr.mxu0 0.0
    %2707 = vmatpush1.msra.mxu0 0.0
    %2708 = vmatprep.subr.mxu0 0.0
    %2709 = vmatpush1.msra.mxu0 0.0
    %2710 = vmatprep.subr.mxu0 0.0
    %2711 = vmatpush1.msra.mxu0 0.0
    %2712 = vmatprep.subr.mxu0 0.0
    %2713 = vmatpush1.msra.mxu0 0.0
    %2714 = vmatprep.subr.mxu0 0.0
    %2715 = vmatpush1.msra.mxu0 0.0
    %2716 = vmatprep.subr.mxu0 0.0
    %2717 = vmatpush1.msra.mxu0 0.0
    %2718 = vmatprep.subr.mxu0 0.0
    %2719 = vmatpush1.msra.mxu0 0.0
    %2720 = vmatprep.subr.mxu0 0.0
    %2721 = vmatpush1.msra.mxu0 0.0
    %2722 = vmatprep.subr.mxu0 0.0
    %2723 = vmatpush1.msra.mxu0 0.0
    %2724 = vmatprep.subr.mxu0 0.0
    %2725 = vmatpush1.msra.mxu0 0.0
    %2726 = vmatprep.subr.mxu0 0.0
    %2727 = vmatpush1.msra.mxu0 0.0
    %2728 = vmatprep.subr.mxu0 0.0
    %2729 = vmatpush1.msra.mxu0 0.0
    %2730 = vmatprep.subr.mxu0 0.0
    %2731 = vmatpush1.msra.mxu0 0.0
    %2732 = vmatprep.subr.mxu0 0.0
    %2733 = vmatpush1.msra.mxu0 0.0
    %2734 = vmatprep.subr.mxu0 0.0
    %2735 = vmatpush1.msra.mxu0 0.0
    %2736 = vmatprep.subr.mxu0 0.0
    %2737 = vmatpush1.msra.mxu0 0.0
    %2738 = vmatprep.subr.mxu0 0.0
    %2739 = vmatpush1.msra.mxu0 0.0
    %2740 = vmatprep.subr.mxu0 0.0
    %2741 = vmatpush1.msra.mxu0 0.0
    %2742 = vmatprep.subr.mxu0 0.0
    %2743 = vmatpush1.msra.mxu0 0.0
    %2744 = vmatprep.mubr.f32.mxu0 0.0
    %v2745 = vand.u32 %v2448, 4294901760
    %v2746 = vsub.f32 %v2448, %v2745
    %v2747 = vand.u32 %v2746, 4294901760
    %2748 = vmatmul.mubr.f32.gmra.mrb[0].mxu0 %v2747
    %v2749 = vpop.f32.mrb[0].mxu0
    %v2750 = vadd.f32 %v2676, %v2749
    %v2751 = vpop.f32.mrb[0].mxu0
    %2752 = vdwg.mxu0
    %2753 = vmatprep.subr.mxu0 0.0
    %v2754 = vand.u32 %v2451, 4294901760
    %v2755 = vsub.f32 %v2451, %v2754
    %v2756 = vand.u32 %v2755, 4294901760
    %2757 = vmatpush1.msra.mxu0 %v2756
    %2758 = vmatprep.subr.mxu0 0.0
    %2759 = vmatpush1.msra.mxu0 0.0
    %2760 = vmatprep.subr.mxu0 0.0
    %2761 = vmatpush1.msra.mxu0 0.0
    %2762 = vmatprep.subr.mxu0 0.0
    %2763 = vmatpush1.msra.mxu0 0.0
    %2764 = vmatprep.subr.mxu0 0.0
    %2765 = vmatpush1.msra.mxu0 0.0
    %2766 = vmatprep.subr.mxu0 0.0
    %2767 = vmatpush1.msra.mxu0 0.0
    %2768 = vmatprep.subr.mxu0 0.0
    %2769 = vmatpush1.msra.mxu0 0.0
    %2770 = vmatprep.subr.mxu0 0.0
    %2771 = vmatpush1.msra.mxu0 0.0
    %2772 = vmatprep.subr.mxu0 0.0
    %2773 = vmatpush1.msra.mxu0 0.0
    %2774 = vmatprep.subr.mxu0 0.0
    %2775 = vmatpush1.msra.mxu0 0.0
    %2776 = vmatprep.subr.mxu0 0.0
    %2777 = vmatpush1.msra.mxu0 0.0
    %2778 = vmatprep.subr.mxu0 0.0
    %2779 = vmatpush1.msra.mxu0 0.0
    %2780 = vmatprep.subr.mxu0 0.0
    %2781 = vmatpush1.msra.mxu0 0.0
    %2782 = vmatprep.subr.mxu0 0.0
    %2783 = vmatpush1.msra.mxu0 0.0
    %2784 = vmatprep.subr.mxu0 0.0
    %2785 = vmatpush1.msra.mxu0 0.0
    %2786 = vmatprep.subr.mxu0 0.0
    %2787 = vmatpush1.msra.mxu0 0.0
    %2788 = vmatprep.subr.mxu0 0.0
    %2789 = vmatpush1.msra.mxu0 0.0
    %2790 = vmatprep.subr.mxu0 0.0
    %2791 = vmatpush1.msra.mxu0 0.0
    %2792 = vmatprep.subr.mxu0 0.0
    %2793 = vmatpush1.msra.mxu0 0.0
    %2794 = vmatprep.subr.mxu0 0.0
    %2795 = vmatpush1.msra.mxu0 0.0
    %2796 = vmatprep.subr.mxu0 0.0
    %2797 = vmatpush1.msra.mxu0 0.0
    %2798 = vmatprep.subr.mxu0 0.0
    %2799 = vmatpush1.msra.mxu0 0.0
    %2800 = vmatprep.subr.mxu0 0.0
    %2801 = vmatpush1.msra.mxu0 0.0
    %2802 = vmatprep.subr.mxu0 0.0
    %2803 = vmatpush1.msra.mxu0 0.0
    %2804 = vmatprep.subr.mxu0 0.0
    %2805 = vmatpush1.msra.mxu0 0.0
    %2806 = vmatprep.subr.mxu0 0.0
    %2807 = vmatpush1.msra.mxu0 0.0
    %2808 = vmatprep.subr.mxu0 0.0
    %2809 = vmatpush1.msra.mxu0 0.0
    %2810 = vmatprep.subr.mxu0 0.0
    %2811 = vmatpush1.msra.mxu0 0.0
    %2812 = vmatprep.subr.mxu0 0.0
    %2813 = vmatpush1.msra.mxu0 0.0
    %2814 = vmatprep.subr.mxu0 0.0
    %2815 = vmatpush1.msra.mxu0 0.0
    %2816 = vmatprep.subr.mxu0 0.0
    %2817 = vmatpush1.msra.mxu0 0.0
    %2818 = vmatprep.subr.mxu0 0.0
    %2819 = vmatpush1.msra.mxu0 0.0
    %2820 = vmatprep.mubr.f32.mxu0 0.0
    %v2821 = vand.u32 %v2448, 4294901760
    %2822 = vmatmul.mubr.f32.gmra.mrb[0].mxu0 %v2821
    %v2823 = vpop.f32.mrb[0].mxu0
    %v2824 = vadd.f32 %v2750, %v2823
    %v2825 = vpop.f32.mrb[0].mxu0
    %2826 = vdwg.mxu0
    %2827 = vmatprep.subr.mxu0 0.0
    %v2828 = vand.u32 %v2451, 4294901760
    %2829 = vmatpush1.msra.mxu0 %v2828
    %2830 = vmatprep.subr.mxu0 0.0
    %2831 = vmatpush1.msra.mxu0 0.0
    %2832 = vmatprep.subr.mxu0 0.0
    %2833 = vmatpush1.msra.mxu0 0.0
    %2834 = vmatprep.subr.mxu0 0.0
    %2835 = vmatpush1.msra.mxu0 0.0
    %2836 = vmatprep.subr.mxu0 0.0
    %2837 = vmatpush1.msra.mxu0 0.0
    %2838 = vmatprep.subr.mxu0 0.0
    %2839 = vmatpush1.msra.mxu0 0.0
    %2840 = vmatprep.subr.mxu0 0.0
    %2841 = vmatpush1.msra.mxu0 0.0
    %2842 = vmatprep.subr.mxu0 0.0
    %2843 = vmatpush1.msra.mxu0 0.0
    %2844 = vmatprep.subr.mxu0 0.0
    %2845 = vmatpush1.msra.mxu0 0.0
    %2846 = vmatprep.subr.mxu0 0.0
    %2847 = vmatpush1.msra.mxu0 0.0
    %2848 = vmatprep.subr.mxu0 0.0
    %2849 = vmatpush1.msra.mxu0 0.0
    %2850 = vmatprep.subr.mxu0 0.0
    %2851 = vmatpush1.msra.mxu0 0.0
    %2852 = vmatprep.subr.mxu0 0.0
    %2853 = vmatpush1.msra.mxu0 0.0
    %2854 = vmatprep.subr.mxu0 0.0
    %2855 = vmatpush1.msra.mxu0 0.0
    %2856 = vmatprep.subr.mxu0 0.0
    %2857 = vmatpush1.msra.mxu0 0.0
    %2858 = vmatprep.subr.mxu0 0.0
    %2859 = vmatpush1.msra.mxu0 0.0
    %2860 = vmatprep.subr.mxu0 0.0
    %2861 = vmatpush1.msra.mxu0 0.0
    %2862 = vmatprep.subr.mxu0 0.0
    %2863 = vmatpush1.msra.mxu0 0.0
    %2864 = vmatprep.subr.mxu0 0.0
    %2865 = vmatpush1.msra.mxu0 0.0
    %2866 = vmatprep.subr.mxu0 0.0
    %2867 = vmatpush1.msra.mxu0 0.0
    %2868 = vmatprep.subr.mxu0 0.0
    %2869 = vmatpush1.msra.mxu0 0.0
    %2870 = vmatprep.subr.mxu0 0.0
    %2871 = vmatpush1.msra.mxu0 0.0
    %2872 = vmatprep.subr.mxu0 0.0
    %2873 = vmatpush1.msra.mxu0 0.0
    %2874 = vmatprep.subr.mxu0 0.0
    %2875 = vmatpush1.msra.mxu0 0.0
    %2876 = vmatprep.subr.mxu0 0.0
    %2877 = vmatpush1.msra.mxu0 0.0
    %2878 = vmatprep.subr.mxu0 0.0
    %2879 = vmatpush1.msra.mxu0 0.0
    %2880 = vmatprep.subr.mxu0 0.0
    %2881 = vmatpush1.msra.mxu0 0.0
    %2882 = vmatprep.subr.mxu0 0.0
    %2883 = vmatpush1.msra.mxu0 0.0
    %2884 = vmatprep.subr.mxu0 0.0
    %2885 = vmatpush1.msra.mxu0 0.0
    %2886 = vmatprep.subr.mxu0 0.0
    %2887 = vmatpush1.msra.mxu0 0.0
    %2888 = vmatprep.subr.mxu0 0.0
    %2889 = vmatpush1.msra.mxu0 0.0
    %2890 = vmatprep.subr.mxu0 0.0
    %2891 = vmatpush1.msra.mxu0 0.0
    %2892 = vmatprep.mubr.f32.mxu0 0.0
    %v2893 = vand.u32 %v2448, 4294901760
    %2894 = vmatmul.mubr.f32.gmra.mrb[0].mxu0 %v2893
    %v2895 = vpop.f32.mrb[0].mxu0
    %v2896 = vadd.f32 %v2824, %v2895
    %v2897 = vpop.f32.mrb[0].mxu0
    %2898 = vdwg.mxu0
    %v2899 = vxor.u32 %v2896, 2147483648
    %v2900 = vmul.f32 %v2899, 1.442695
    %v2901 = vpow.pop %v2900
    %v2902 = vadd.f32 %v2901, 1.0
    %v2903 = vrcp.pop %v2902
    %v2904 = vmul.f32 1.0, %v2903
    %2905 = vst [vmem:[#allocation3] sm:$0x1] %v2904
    // Predicated region
    $region54: #{tpu_custom_call.1} parent=1 // pred_check
      _
    $region55: #{tpu_custom_call.1} parent=1 // pred_check_branch
      %2907 = sbr.rel (0) target = $region57
    $region56: #{tpu_custom_call.1} parent=1 // pred_region
      %s2909 = ssub.s32 16, 16
      %2910 = vsyncadd [#allocation4], %s2909
      %s2912 = sshll.u32 [#allocation3], 4
      %s2913 = int_to_ptr.vmem [resolvable:$true] %s2912
      %2915 = dma.vmem_to_hbm [thread:$0]  %s2913, 16, %s13, [#allocation4]
    $region57: #{tpu_custom_call.1} parent=1 // pred_fallthru
      _
    // Predicated region
    $region58: #{tpu_custom_call.1} parent=1 // pred_check
      _
    $region59: #{tpu_custom_call.1} parent=1 // pred_check_branch
      %2917 = sbr.rel (0) target = $region61
    $region60: #{tpu_custom_call.1} parent=1 // pred_region
      %2918 = dma.done [#allocation4], 16
    $region61: #{tpu_custom_call.1} parent=1 // pred_fallthru
      _
    %2919 = vsyncpa [#allocation4], 1

</llo_original>
